<compile_context>
chip_gen: v7x
topology: tpu7x:2x2x1
jax: 0.10.0
libtpu: 0.0.40
codegen_flags: <defaults>
</compile_context>

<pallas_src>
import functools
from math import sqrt

import jax
import jax.numpy as jnp
from jax import lax
from jax.experimental import pallas as pl
from jax.experimental.pallas import tpu as pltpu


def _round_up(v, m):
    return ((v + m - 1) // m) * m


def _full_spec(a):
    nd = a.ndim
    return pl.BlockSpec(a.shape, lambda nd=nd: (0,) * nd)


# ---------------------------------------------------------------------------
# Pallas kernels
# ---------------------------------------------------------------------------
def tgat_node_kernel(x_ref, w_ref, adst_ref, xh_ref, sdst_ref):
    # xh = lin(x) for one node tile; destination attention vector folded into
    # an MXU matmul so the edge kernel can gather a per-node scalar score.
    xh = jnp.dot(x_ref[...], w_ref[...], preferred_element_type=jnp.float32)
    xh_ref[...] = xh.astype(xh_ref.dtype)
    sdst_ref[...] = jnp.dot(xh, adst_ref[...],
                            preferred_element_type=jnp.float32)


def tgat_edge_kernel(gsrc_ref, gdst_ref, atime_ref, mask_ref,
                     xh_ref, asrc_ref, sdst_ref,
                     out_ref, acc_ref, den_ref, *, inv_sqrt_c):
    e = pl.program_id(0)

    @pl.when(e == 0)
    def _init():
        acc_ref[...] = jnp.zeros_like(acc_ref)
        den_ref[...] = jnp.zeros_like(den_ref)

    g_src = gsrc_ref[...]                       # (TE, N_pad) bf16 one-hot
    g_dst = gdst_ref[...]                       # (TE, N_pad) bf16 one-hot

    # Gather source-node features per edge (MXU one-hot matmul).
    x_src = jnp.dot(g_src, xh_ref[...],
                    preferred_element_type=jnp.float32)          # (TE, C_pad)

    # Attention logits: src term reuses the gathered features, dst term is a
    # gather of node-space scores, time term is precomputed per edge.
    a_src = jnp.dot(x_src, asrc_ref[...],
                    preferred_element_type=jnp.float32)          # (TE, 1)
    a_dst = jnp.dot(g_dst, sdst_ref[...],
                    preferred_element_type=jnp.float32)          # (TE, 1)

    alpha = (a_src + a_dst + atime_ref[...]) * inv_sqrt_c        # (TE, 1)
    alpha = jnp.where(alpha >= 0.0, alpha, 0.2 * alpha)          # leaky_relu(0.2)
    alpha = jnp.exp(-alpha) * mask_ref[...]                      # mask padded edges

    den_ref[...] += jnp.sum(alpha, keepdims=True)                # global denom acc

    # Messages, then scatter-add to destination nodes by contracting the edge
    # axis of g_dst (trans_a matmul, no materialized g_dst.T).
    msg = (x_src * alpha).astype(jnp.bfloat16)                   # (TE, C_pad)
    acc_ref[...] += lax.dot_general(g_dst, msg, (((0,), (0,)), ((), ())),
                                    preferred_element_type=jnp.float32)

    @pl.when(e == pl.num_programs(0) - 1)
    def _finalize():
        inv_den = pl.reciprocal(den_ref[...], approx=True)       # EUP, ~free
        agg = acc_ref[...] * inv_den
        # Fused outer F.leaky_relu(x, 0.2) applied by TGNN after each layer.
        out_ref[...] = jnp.where(agg >= 0.0, agg, 0.2 * agg)


def time_mlp_kernel(t_ref, w1_ref, b1_ref, w2_ref, b2_ref, o_ref):
    # nn.Sequential(Linear(1,T), ReLU, Linear(T, emb_dim)) — unused downstream.
    h = jnp.dot(t_ref[...], w1_ref[...], preferred_element_type=jnp.float32) + b1_ref[...]
    h = jnp.maximum(h, 0.0)
    o_ref[...] = jnp.dot(h, w2_ref[...], preferred_element_type=jnp.float32) + b2_ref[...]


# ---------------------------------------------------------------------------
# Wrappers
# ---------------------------------------------------------------------------
_VMEM_LIMIT = 48 * 1024 * 1024   # headroom even on v7x's 64 MiB VMEM


def _tgat_node(x_pad, w_pad, adst_pad, *, node_tile):
    n_pad, cin_pad = x_pad.shape
    c_pad = w_pad.shape[1]
    return pl.pallas_call(
        tgat_node_kernel,
        out_shape=(jax.ShapeDtypeStruct((n_pad, c_pad), jnp.bfloat16),
                   jax.ShapeDtypeStruct((n_pad, 1), jnp.float32)),
        grid=(n_pad // node_tile,),
        in_specs=[pl.BlockSpec((node_tile, cin_pad), lambda i: (i, 0)),
                  pl.BlockSpec((cin_pad, c_pad), lambda i: (0, 0)),
                  pl.BlockSpec((c_pad, 1), lambda i: (0, 0))],
        out_specs=(pl.BlockSpec((node_tile, c_pad), lambda i: (i, 0)),
                   pl.BlockSpec((node_tile, 1), lambda i: (i, 0))),
        compiler_params=pltpu.CompilerParams(
            dimension_semantics=("parallel",),
            vmem_limit_bytes=_VMEM_LIMIT),
    )(x_pad, w_pad, adst_pad)


def _tgat_edge(g_src, g_dst, a_time, mask, xh, asrc_pad, sdst, c_out, *, edge_tile):
    e_pad, n_pad = g_src.shape
    c_pad = xh.shape[1]
    kern = functools.partial(tgat_edge_kernel, inv_sqrt_c=1.0 / sqrt(c_out))
    return pl.pallas_call(
        kern,
        out_shape=jax.ShapeDtypeStruct((n_pad, c_pad), jnp.float32),
        grid=(e_pad // edge_tile,),
        in_specs=[pl.BlockSpec((edge_tile, n_pad), lambda i: (i, 0)),
                  pl.BlockSpec((edge_tile, n_pad), lambda i: (i, 0)),
                  pl.BlockSpec((edge_tile, 1), lambda i: (i, 0)),
                  pl.BlockSpec((edge_tile, 1), lambda i: (i, 0)),
                  pl.BlockSpec((n_pad, c_pad), lambda i: (0, 0)),
                  pl.BlockSpec((c_pad, 1), lambda i: (0, 0)),
                  pl.BlockSpec((n_pad, 1), lambda i: (0, 0))],
        out_specs=pl.BlockSpec((n_pad, c_pad), lambda i: (0, 0)),
        scratch_shapes=[pltpu.VMEM((n_pad, c_pad), jnp.float32),
                        pltpu.VMEM((1, 1), jnp.float32)],
        compiler_params=pltpu.CompilerParams(
            dimension_semantics=("arbitrary",),
            vmem_limit_bytes=_VMEM_LIMIT),
    )(g_src, g_dst, a_time, mask, xh, asrc_pad, sdst)


def tgat_layer(x_pad, p, g_src, g_dst, et_pad, mask, *, node_tile, edge_tile):
    c_in, c_out = p["w_lin"].shape
    cin_pad = x_pad.shape[1]
    c_pad = _round_up(c_out, 128)

    # Lane-pad parameters (zero padding -> exact).
    w_pad = jnp.pad(p["w_lin"], ((0, cin_pad - c_in), (0, c_pad - c_out)))
    asrc_pad = jnp.pad(p["att_src"].reshape(-1, 1), ((0, c_pad - c_out), (0, 0)))
    adst_pad = jnp.pad(p["att_dst"].reshape(-1, 1), ((0, c_pad - c_out), (0, 0)))

    # Time branch collapses to a per-edge scalar affine (rank-1 algebra):
    # (time_enc(t) * att_time).sum(-1) = t * sum(w_t*att_t) + sum(b_t*att_t).
    k_w = jnp.sum(p["w_time"] * p["att_time"])
    k_b = jnp.sum(p["b_time"] * p["att_time"])
    a_time = et_pad * k_w + k_b

    xh, sdst = _tgat_node(x_pad, w_pad, adst_pad, node_tile=node_tile)
    out = _tgat_edge(g_src, g_dst, a_time, mask, xh, asrc_pad, sdst, c_out,
                     edge_tile=edge_tile)
    return out   # (n_pad, c_pad) f32; padded rows/cols stay exactly zero


def time_mlp(et, p):
    e = et.shape[0]
    emb_dim = p["w2"].shape[1]
    args = (et, p["w1"], p["b1"], p["w2"], p["b2"])
    return pl.pallas_call(
        time_mlp_kernel,
        out_shape=jax.ShapeDtypeStruct((e, emb_dim), jnp.float32),
        in_specs=[_full_spec(a) for a in args],
        out_specs=pl.BlockSpec((e, emb_dim), lambda: (0, 0)),
    )(*args)


def tgnn_forward(params, codes, edge_index, edge_time, *,
                 node_tile=256, edge_tile=512, compute_time_feat=False):
    n = codes.shape[0]
    e = edge_index.shape[1]
    emb_dim = params["emb"].shape[1]

    # Tile sizing: sublane-aligned, clamped to the (padded) problem size.
    node_tile = _round_up(min(node_tile, _round_up(n, 8)), 8)
    n_pad = _round_up(n, node_tile)
    edge_tile = _round_up(min(edge_tile, _round_up(e, 8)), 8)
    e_pad = _round_up(e, edge_tile)

    # Glue: embedding lookup, lane/sublane padding, one-hot gather operands.
    x = jnp.take(params["emb"], codes, axis=0).astype(jnp.float32)
    cin_pad = _round_up(emb_dim, 128)
    x_pad = jnp.pad(x, ((0, n_pad - n), (0, cin_pad - emb_dim)))

    g_src = jnp.pad(jax.nn.one_hot(edge_index[0], n_pad, dtype=jnp.bfloat16),
                    ((0, e_pad - e), (0, 0)))
    g_dst = jnp.pad(jax.nn.one_hot(edge_index[1], n_pad, dtype=jnp.bfloat16),
                    ((0, e_pad - e), (0, 0)))
    mask = jnp.pad(jnp.ones((e, 1), jnp.float32), ((0, e_pad - e), (0, 0)))
    et_pad = jnp.pad(edge_time.reshape(-1, 1).astype(jnp.float32),
                     ((0, e_pad - e), (0, 0)))

    # TODO(synk): the reference computes time_enc(edge_time) at TGNN level and
    # passes it as `edge_attr=`, but TGATConv.forward has no such argument and
    # its output never reaches the network output; skipped unless requested.
    tfeat = time_mlp(et_pad[:e], params["time_mlp"]) if compute_time_feat else None

    h = x_pad
    for i, layer_p in enumerate(params["layers"]):
        h_res = h  # noqa: F841
        h = tgat_layer(h, layer_p, g_src, g_dst, et_pad, mask,
                       node_tile=node_tile, edge_tile=edge_tile)
        if i % 2 == 1:
            # TODO(synk): reference residual `x = x + x_res` mixes (N, emb_dim)
            # with (N, 2*emb_dim) and would raise in PyTorch; skipped here.
            pass

    out = h[:n, :emb_dim]
    return (out, tfeat) if compute_time_feat else out


# ---------------------------------------------------------------------------
# Deterministic parameter init (synthetic, mirrors module __init__ shapes)
# ---------------------------------------------------------------------------
def _xavier(key, shape):
    fan_in, fan_out = shape[-2], shape[-1]
    a = sqrt(6.0 / (fan_in + fan_out))
    return jax.random.uniform(key, shape, jnp.float32, -a, a)


def init_params(key, num_codes, emb_dim, time_dim, layer_time_dim=64):
    keys = iter(jax.random.split(key, 32))
    params = {
        "emb": jax.random.normal(next(keys), (num_codes, emb_dim), jnp.float32) * 0.1,
        "time_mlp": {
            "w1": _xavier(next(keys), (1, time_dim)),
            "b1": jnp.zeros((1, time_dim), jnp.float32),
            "w2": _xavier(next(keys), (time_dim, emb_dim)),
            "b2": jnp.zeros((1, emb_dim), jnp.float32),
        },
        "layers": [],
    }
    # TGATConv(emb_dim, 2*emb_dim) then TGATConv(2*emb_dim, emb_dim); heads=1.
    for c_in, c_out in [(emb_dim, 2 * emb_dim), (2 * emb_dim, emb_dim)]:
        params["layers"].append({
            "w_lin": _xavier(next(keys), (c_in, c_out)),
            "w_time": _xavier(next(keys), (1, layer_time_dim)),
            "b_time": jnp.zeros((1, layer_time_dim), jnp.float32),
            "att_src": _xavier(next(keys), (1, c_out)),
            "att_dst": _xavier(next(keys), (1, c_out)),
            "att_time": _xavier(next(keys), (1, layer_time_dim)),
        })
    return params


# ---------------------------------------------------------------------------
if __name__ == "__main__":
    num_codes, emb_dim, time_dim = 20, 32, 64
    n_nodes, n_edges = 16, 24

    root = jax.random.PRNGKey(0)
    k_params, k_codes, k_edges, k_time = jax.random.split(root, 4)

    params = init_params(k_params, num_codes, emb_dim, time_dim)
    codes = jax.random.randint(k_codes, (n_nodes,), 0, num_codes, dtype=jnp.int32)
    edge_index = jax.random.randint(k_edges, (2, n_edges), 0, n_nodes, dtype=jnp.int32)
    edge_time = jax.random.uniform(k_time, (n_edges,), dtype=jnp.float32)

    # edge_tile=8 exercises the multi-step edge accumulation path (3 grid steps).
    fwd = jax.jit(functools.partial(tgnn_forward, node_tile=256, edge_tile=8))
    out = fwd(params, codes, edge_index, edge_time)
    jax.block_until_ready(out)

    assert out.shape == (n_nodes, emb_dim), out.shape
    assert bool(jnp.all(jnp.isfinite(out)))
    print("KERNEL_OK")
</pallas_src>

<mosaic_0001>
module attributes {stable_mosaic.version = 11 : i64} {
  func.func @tgat_node_kernel(%arg0: i32, %arg1: memref<16x128xf32, #tpu.memory_space<vmem>>, %arg2: memref<128x128xf32, #tpu.memory_space<vmem>>, %arg3: memref<128x1xf32, #tpu.memory_space<vmem>>, %arg4: memref<16x128xbf16, #tpu.memory_space<vmem>>, %arg5: memref<16x1xf32, #tpu.memory_space<vmem>>) attributes {dimension_semantics = [#tpu.dimension_semantics<parallel>], iteration_bounds = array<i64: 1>, scalar_prefetch = 0 : i64, scratch_operands = 0 : i64, tpu.core_type = #tpu.core_type<tc>, window_params = [{transform_indices = @transform_0, window_bounds = array<i64: 16, 128>}, {pipeline_mode = #tpu.pipeline_mode<synchronous>, transform_indices = @transform_1, window_bounds = array<i64: 128, 128>}, {pipeline_mode = #tpu.pipeline_mode<synchronous>, transform_indices = @transform_2, window_bounds = array<i64: 128, 1>}, {transform_indices = @transform_3, window_bounds = array<i64: 16, 128>}, {transform_indices = @transform_4, window_bounds = array<i64: 16, 1>}]} {
    %c0 = arith.constant 0 : index
    %c0_0 = arith.constant 0 : index
    %0 = vector.load %arg1[%c0, %c0_0] : memref<16x128xf32, #tpu.memory_space<vmem>>, vector<16x128xf32>
    %c0_1 = arith.constant 0 : index
    %c0_2 = arith.constant 0 : index
    %1 = vector.load %arg2[%c0_1, %c0_2] : memref<128x128xf32, #tpu.memory_space<vmem>>, vector<128x128xf32>
    %cst = arith.constant dense<0.000000e+00> : vector<16x128xf32>
    %2 = tpu.matmul %0, %1, %cst {dimension_numbers = #tpu.dot_dimension_numbers<[1], [0], [0], [1], [0, 0, 1, 1], [], []>} : vector<16x128xf32>, vector<128x128xf32>, vector<16x128xf32> -> vector<16x128xf32>
    %3 = arith.truncf %2 : vector<16x128xf32> to vector<16x128xbf16>
    %c0_3 = arith.constant 0 : index
    %c0_4 = arith.constant 0 : index
    %4 = vector.load %arg4[%c0_3, %c0_4] : memref<16x128xbf16, #tpu.memory_space<vmem>>, vector<16x128xbf16>
    tpu.vector_store %arg4[%c0_3, %c0_4], %3 {strides = array<i32>} : memref<16x128xbf16, #tpu.memory_space<vmem>>, vector<16x128xbf16>,
    %c0_5 = arith.constant 0 : index
    %c0_6 = arith.constant 0 : index
    %5 = vector.load %arg3[%c0_5, %c0_6] : memref<128x1xf32, #tpu.memory_space<vmem>>, vector<128x1xf32>
    %cst_7 = arith.constant dense<0.000000e+00> : vector<16x1xf32>
    %6 = tpu.matmul %2, %5, %cst_7 {dimension_numbers = #tpu.dot_dimension_numbers<[1], [0], [0], [1], [0, 0, 1, 1], [], []>} : vector<16x128xf32>, vector<128x1xf32>, vector<16x1xf32> -> vector<16x1xf32>
    %c0_8 = arith.constant 0 : index
    %c0_9 = arith.constant 0 : index
    %7 = vector.load %arg5[%c0_8, %c0_9] : memref<16x1xf32, #tpu.memory_space<vmem>>, vector<16x1xf32>
    tpu.vector_store %arg5[%c0_8, %c0_9], %6 {strides = array<i32>} : memref<16x1xf32, #tpu.memory_space<vmem>>, vector<16x1xf32>,
    return
  }
  func.func @transform_0(%arg0: i32) -> (i32, i32) {
    %c0_i32 = arith.constant 0 : i32
    %c0_i32_0 = arith.constant 0 : i32
    return %arg0, %c0_i32 : i32, i32
  }
  func.func @transform_1(%arg0: i32) -> (i32, i32) {
    %c0_i32 = arith.constant 0 : i32
    %c0_i32_0 = arith.constant 0 : i32
    %c0_i32_1 = arith.constant 0 : i32
    return %c0_i32, %c0_i32_0 : i32, i32
  }
  func.func @transform_2(%arg0: i32) -> (i32, i32) {
    %c0_i32 = arith.constant 0 : i32
    %c0_i32_0 = arith.constant 0 : i32
    %c0_i32_1 = arith.constant 0 : i32
    return %c0_i32, %c0_i32_0 : i32, i32
  }
  func.func @transform_3(%arg0: i32) -> (i32, i32) {
    %c0_i32 = arith.constant 0 : i32
    %c0_i32_0 = arith.constant 0 : i32
    return %arg0, %c0_i32 : i32, i32
  }
  func.func @transform_4(%arg0: i32) -> (i32, i32) {
    %c0_i32 = arith.constant 0 : i32
    %c0_i32_0 = arith.constant 0 : i32
    return %arg0, %c0_i32 : i32, i32
  }
}

module attributes {stable_mosaic.version = 11 : i64} {
  func.func @tgat_edge_kernel(%arg0: i32, %arg1: memref<8x16xbf16, #tpu.memory_space<vmem>>, %arg2: memref<8x16xbf16, #tpu.memory_space<vmem>>, %arg3: memref<8x1xf32, #tpu.memory_space<vmem>>, %arg4: memref<8x1xf32, #tpu.memory_space<vmem>>, %arg5: memref<16x128xbf16, #tpu.memory_space<vmem>>, %arg6: memref<128x1xf32, #tpu.memory_space<vmem>>, %arg7: memref<16x1xf32, #tpu.memory_space<vmem>>, %arg8: memref<16x128xf32, #tpu.memory_space<vmem>>, %arg9: memref<16x128xf32, #tpu.memory_space<vmem>>, %arg10: memref<1x1xf32, #tpu.memory_space<vmem>>) attributes {dimension_semantics = [#tpu.dimension_semantics<arbitrary>], iteration_bounds = array<i64: 3>, scalar_prefetch = 0 : i64, scratch_operands = 2 : i64, tpu.core_type = #tpu.core_type<tc>, window_params = [{transform_indices = @transform_0, window_bounds = array<i64: 8, 16>}, {transform_indices = @transform_1, window_bounds = array<i64: 8, 16>}, {transform_indices = @transform_2, window_bounds = array<i64: 8, 1>}, {transform_indices = @transform_3, window_bounds = array<i64: 8, 1>}, {pipeline_mode = #tpu.pipeline_mode<synchronous>, transform_indices = @transform_4, window_bounds = array<i64: 16, 128>}, {pipeline_mode = #tpu.pipeline_mode<synchronous>, transform_indices = @transform_5, window_bounds = array<i64: 128, 1>}, {pipeline_mode = #tpu.pipeline_mode<synchronous>, transform_indices = @transform_6, window_bounds = array<i64: 16, 1>}, {pipeline_mode = #tpu.pipeline_mode<synchronous>, transform_indices = @transform_7, window_bounds = array<i64: 16, 128>}]} {
    %c0_i32 = arith.constant 0 : i32
    %0 = arith.cmpi eq, %arg0, %c0_i32 : i32
    %1 = arith.extui %0 : i1 to i32
    %c0_i32_0 = arith.constant 0 : i32
    %2 = arith.cmpi ne, %1, %c0_i32_0 : i32
    scf.if %2 {
      %cst_31 = arith.constant 0.000000e+00 : f32
      %44 = vector.broadcast %cst_31 : f32 to vector<16x128xf32>
      %c0_32 = arith.constant 0 : index
      %c0_33 = arith.constant 0 : index
      %45 = vector.load %arg9[%c0_32, %c0_33] : memref<16x128xf32, #tpu.memory_space<vmem>>, vector<16x128xf32>
      tpu.vector_store %arg9[%c0_32, %c0_33], %44 {strides = array<i32>} : memref<16x128xf32, #tpu.memory_space<vmem>>, vector<16x128xf32>,
      %cst_34 = arith.constant 0.000000e+00 : f32
      %46 = vector.broadcast %cst_34 : f32 to vector<1x1xf32>
      %c0_35 = arith.constant 0 : index
      %c0_36 = arith.constant 0 : index
      %47 = vector.load %arg10[%c0_35, %c0_36] : memref<1x1xf32, #tpu.memory_space<vmem>>, vector<1x1xf32>
      tpu.vector_store %arg10[%c0_35, %c0_36], %46 {strides = array<i32>} : memref<1x1xf32, #tpu.memory_space<vmem>>, vector<1x1xf32>,
    } else {
    }
    %c0 = arith.constant 0 : index
    %c0_1 = arith.constant 0 : index
    %3 = vector.load %arg1[%c0, %c0_1] : memref<8x16xbf16, #tpu.memory_space<vmem>>, vector<8x16xbf16>
    %c0_2 = arith.constant 0 : index
    %c0_3 = arith.constant 0 : index
    %4 = vector.load %arg2[%c0_2, %c0_3] : memref<8x16xbf16, #tpu.memory_space<vmem>>, vector<8x16xbf16>
    %c0_4 = arith.constant 0 : index
    %c0_5 = arith.constant 0 : index
    %5 = vector.load %arg5[%c0_4, %c0_5] : memref<16x128xbf16, #tpu.memory_space<vmem>>, vector<16x128xbf16>
    %cst = arith.constant dense<0.000000e+00> : vector<8x128xf32>
    %6 = tpu.matmul %3, %5, %cst {dimension_numbers = #tpu.dot_dimension_numbers<[1], [0], [0], [1], [0, 0, 1, 1], [], []>} : vector<8x16xbf16>, vector<16x128xbf16>, vector<8x128xf32> -> vector<8x128xf32>
    %c0_6 = arith.constant 0 : index
    %c0_7 = arith.constant 0 : index
    %7 = vector.load %arg6[%c0_6, %c0_7] : memref<128x1xf32, #tpu.memory_space<vmem>>, vector<128x1xf32>
    %cst_8 = arith.constant dense<0.000000e+00> : vector<8x1xf32>
    %8 = tpu.matmul %6, %7, %cst_8 {dimension_numbers = #tpu.dot_dimension_numbers<[1], [0], [0], [1], [0, 0, 1, 1], [], []>} : vector<8x128xf32>, vector<128x1xf32>, vector<8x1xf32> -> vector<8x1xf32>
    %c0_9 = arith.constant 0 : index
    %c0_10 = arith.constant 0 : index
    %9 = vector.load %arg7[%c0_9, %c0_10] : memref<16x1xf32, #tpu.memory_space<vmem>>, vector<16x1xf32>
    %cst_11 = arith.constant dense<0.000000e+00> : vector<8x1xf32>
    %10 = tpu.matmul %4, %9, %cst_11 {dimension_numbers = #tpu.dot_dimension_numbers<[1], [0], [0], [1], [0, 0, 1, 1], [], []>} : vector<8x16xbf16>, vector<16x1xf32>, vector<8x1xf32> -> vector<8x1xf32>
    %11 = arith.addf %8, %10 : vector<8x1xf32>
    %c0_12 = arith.constant 0 : index
    %c0_13 = arith.constant 0 : index
    %12 = vector.load %arg3[%c0_12, %c0_13] : memref<8x1xf32, #tpu.memory_space<vmem>>, vector<8x1xf32>
    %13 = arith.addf %11, %12 : vector<8x1xf32>
    %cst_14 = arith.constant 1.250000e-01 : f32
    %14 = vector.broadcast %cst_14 : f32 to vector<8x1xf32>
    %15 = arith.mulf %13, %14 : vector<8x1xf32>
    %cst_15 = arith.constant 0.000000e+00 : f32
    %16 = vector.broadcast %cst_15 : f32 to vector<8x1xf32>
    %17 = arith.cmpf oge, %15, %16 : vector<8x1xf32>
    %cst_16 = arith.constant 2.000000e-01 : f32
    %18 = vector.broadcast %cst_16 : f32 to vector<8x1xf32>
    %19 = arith.mulf %18, %15 : vector<8x1xf32>
    %20 = arith.select %17, %15, %19 : vector<8x1xi1>, vector<8x1xf32>
    %cst_17 = arith.constant 0.000000e+00 : f32
    %21 = vector.broadcast %cst_17 : f32 to vector<8x1xf32>
    %22 = arith.subf %21, %20 : vector<8x1xf32>
    %23 = math.exp %22 : vector<8x1xf32>
    %c0_18 = arith.constant 0 : index
    %c0_19 = arith.constant 0 : index
    %24 = vector.load %arg4[%c0_18, %c0_19] : memref<8x1xf32, #tpu.memory_space<vmem>>, vector<8x1xf32>
    %25 = arith.mulf %23, %24 : vector<8x1xf32>
    %c0_20 = arith.constant 0 : index
    %c0_21 = arith.constant 0 : index
    %26 = vector.load %arg10[%c0_20, %c0_21] : memref<1x1xf32, #tpu.memory_space<vmem>>, vector<1x1xf32>
    %27 = vector.shape_cast %25 : vector<8x1xf32> to vector<1x8x1xf32>
    %cst_22 = arith.constant dense<0.000000e+00> : vector<1xf32>
    %28 = vector.multi_reduction <add>, %27, %cst_22 [1, 2] : vector<1x8x1xf32> to vector<1xf32>
    %29 = vector.shape_cast %28 : vector<1xf32> to vector<1x1x1xf32>
    %30 = vector.extract %29[0, 0, 0] : f32 from vector<1x1x1xf32>
    %31 = vector.broadcast %30 : f32 to vector<1x1xf32>
    %32 = arith.addf %26, %31 : vector<1x1xf32>
    %c0_23 = arith.constant 0 : index
    %c0_24 = arith.constant 0 : index
    %33 = vector.load %arg10[%c0_23, %c0_24] : memref<1x1xf32, #tpu.memory_space<vmem>>, vector<1x1xf32>
    tpu.vector_store %arg10[%c0_23, %c0_24], %32 {strides = array<i32>} : memref<1x1xf32, #tpu.memory_space<vmem>>, vector<1x1xf32>,
    %34 = vector.broadcast %25 : vector<8x1xf32> to vector<8x128xf32>
    %35 = arith.mulf %6, %34 : vector<8x128xf32>
    %36 = arith.truncf %35 : vector<8x128xf32> to vector<8x128xbf16>
    %c0_25 = arith.constant 0 : index
    %c0_26 = arith.constant 0 : index
    %37 = vector.load %arg9[%c0_25, %c0_26] : memref<16x128xf32, #tpu.memory_space<vmem>>, vector<16x128xf32>
    %cst_27 = arith.constant dense<0.000000e+00> : vector<16x128xf32>
    %38 = tpu.matmul %4, %36, %cst_27 {dimension_numbers = #tpu.dot_dimension_numbers<[0], [0], [1], [1], [0, 1, 1, 1], [], []>} : vector<8x16xbf16>, vector<8x128xbf16>, vector<16x128xf32> -> vector<16x128xf32>
    %39 = arith.addf %37, %38 : vector<16x128xf32>
    %c0_28 = arith.constant 0 : index
    %c0_29 = arith.constant 0 : index
    %40 = vector.load %arg9[%c0_28, %c0_29] : memref<16x128xf32, #tpu.memory_space<vmem>>, vector<16x128xf32>
    tpu.vector_store %arg9[%c0_28, %c0_29], %39 {strides = array<i32>} : memref<16x128xf32, #tpu.memory_space<vmem>>, vector<16x128xf32>,
    %c2_i32 = arith.constant 2 : i32
    %41 = arith.cmpi eq, %arg0, %c2_i32 : i32
    %42 = arith.extui %41 : i1 to i32
    %c0_i32_30 = arith.constant 0 : i32
    %43 = arith.cmpi ne, %42, %c0_i32_30 : i32
    scf.if %43 {
      %c0_31 = arith.constant 0 : index
      %c0_32 = arith.constant 0 : index
      %44 = vector.load %arg10[%c0_31, %c0_32] : memref<1x1xf32, #tpu.memory_space<vmem>>, vector<1x1xf32>
      %45 = tpu.reciprocal %44 {approx = true} : vector<1x1xf32> -> vector<1x1xf32>
      %c0_33 = arith.constant 0 : index
      %c0_34 = arith.constant 0 : index
      %46 = vector.load %arg9[%c0_33, %c0_34] : memref<16x128xf32, #tpu.memory_space<vmem>>, vector<16x128xf32>
      %47 = vector.broadcast %45 : vector<1x1xf32> to vector<16x128xf32>
      %48 = arith.mulf %46, %47 : vector<16x128xf32>
      %cst_35 = arith.constant 0.000000e+00 : f32
      %49 = vector.broadcast %cst_35 : f32 to vector<16x128xf32>
      %50 = arith.cmpf oge, %48, %49 : vector<16x128xf32>
      %cst_36 = arith.constant 2.000000e-01 : f32
      %51 = vector.broadcast %cst_36 : f32 to vector<16x128xf32>
      %52 = arith.mulf %51, %48 : vector<16x128xf32>
      %53 = arith.select %50, %48, %52 : vector<16x128xi1>, vector<16x128xf32>
      %c0_37 = arith.constant 0 : index
      %c0_38 = arith.constant 0 : index
      %54 = vector.load %arg8[%c0_37, %c0_38] : memref<16x128xf32, #tpu.memory_space<vmem>>, vector<16x128xf32>
      tpu.vector_store %arg8[%c0_37, %c0_38], %53 {strides = array<i32>} : memref<16x128xf32, #tpu.memory_space<vmem>>, vector<16x128xf32>,
    } else {
    }
    return
  }
  func.func @transform_0(%arg0: i32) -> (i32, i32) {
    %c0_i32 = arith.constant 0 : i32
    %c0_i32_0 = arith.constant 0 : i32
    return %arg0, %c0_i32 : i32, i32
  }
  func.func @transform_1(%arg0: i32) -> (i32, i32) {
    %c0_i32 = arith.constant 0 : i32
    %c0_i32_0 = arith.constant 0 : i32
    return %arg0, %c0_i32 : i32, i32
  }
  func.func @transform_2(%arg0: i32) -> (i32, i32) {
    %c0_i32 = arith.constant 0 : i32
    %c0_i32_0 = arith.constant 0 : i32
    return %arg0, %c0_i32 : i32, i32
  }
  func.func @transform_3(%arg0: i32) -> (i32, i32) {
    %c0_i32 = arith.constant 0 : i32
    %c0_i32_0 = arith.constant 0 : i32
    return %arg0, %c0_i32 : i32, i32
  }
  func.func @transform_4(%arg0: i32) -> (i32, i32) {
    %c0_i32 = arith.constant 0 : i32
    %c0_i32_0 = arith.constant 0 : i32
    %c0_i32_1 = arith.constant 0 : i32
    return %c0_i32, %c0_i32_0 : i32, i32
  }
  func.func @transform_5(%arg0: i32) -> (i32, i32) {
    %c0_i32 = arith.constant 0 : i32
    %c0_i32_0 = arith.constant 0 : i32
    %c0_i32_1 = arith.constant 0 : i32
    return %c0_i32, %c0_i32_0 : i32, i32
  }
  func.func @transform_6(%arg0: i32) -> (i32, i32) {
    %c0_i32 = arith.constant 0 : i32
    %c0_i32_0 = arith.constant 0 : i32
    %c0_i32_1 = arith.constant 0 : i32
    return %c0_i32, %c0_i32_0 : i32, i32
  }
  func.func @transform_7(%arg0: i32) -> (i32, i32) {
    %c0_i32 = arith.constant 0 : i32
    %c0_i32_0 = arith.constant 0 : i32
    %c0_i32_1 = arith.constant 0 : i32
    return %c0_i32, %c0_i32_0 : i32, i32
  }
}

module attributes {stable_mosaic.version = 11 : i64} {
  func.func @tgat_edge_kernel(%arg0: i32, %arg1: memref<8x16xbf16, #tpu.memory_space<vmem>>, %arg2: memref<8x16xbf16, #tpu.memory_space<vmem>>, %arg3: memref<8x1xf32, #tpu.memory_space<vmem>>, %arg4: memref<8x1xf32, #tpu.memory_space<vmem>>, %arg5: memref<16x128xbf16, #tpu.memory_space<vmem>>, %arg6: memref<128x1xf32, #tpu.memory_space<vmem>>, %arg7: memref<16x1xf32, #tpu.memory_space<vmem>>, %arg8: memref<16x128xf32, #tpu.memory_space<vmem>>, %arg9: memref<16x128xf32, #tpu.memory_space<vmem>>, %arg10: memref<1x1xf32, #tpu.memory_space<vmem>>) attributes {dimension_semantics = [#tpu.dimension_semantics<arbitrary>], iteration_bounds = array<i64: 3>, scalar_prefetch = 0 : i64, scratch_operands = 2 : i64, tpu.core_type = #tpu.core_type<tc>, window_params = [{transform_indices = @transform_0, window_bounds = array<i64: 8, 16>}, {transform_indices = @transform_1, window_bounds = array<i64: 8, 16>}, {transform_indices = @transform_2, window_bounds = array<i64: 8, 1>}, {transform_indices = @transform_3, window_bounds = array<i64: 8, 1>}, {pipeline_mode = #tpu.pipeline_mode<synchronous>, transform_indices = @transform_4, window_bounds = array<i64: 16, 128>}, {pipeline_mode = #tpu.pipeline_mode<synchronous>, transform_indices = @transform_5, window_bounds = array<i64: 128, 1>}, {pipeline_mode = #tpu.pipeline_mode<synchronous>, transform_indices = @transform_6, window_bounds = array<i64: 16, 1>}, {pipeline_mode = #tpu.pipeline_mode<synchronous>, transform_indices = @transform_7, window_bounds = array<i64: 16, 128>}]} {
    %c0_i32 = arith.constant 0 : i32
    %0 = arith.cmpi eq, %arg0, %c0_i32 : i32
    %1 = arith.extui %0 : i1 to i32
    %c0_i32_0 = arith.constant 0 : i32
    %2 = arith.cmpi ne, %1, %c0_i32_0 : i32
    scf.if %2 {
      %cst_31 = arith.constant 0.000000e+00 : f32
      %44 = vector.broadcast %cst_31 : f32 to vector<16x128xf32>
      %c0_32 = arith.constant 0 : index
      %c0_33 = arith.constant 0 : index
      %45 = vector.load %arg9[%c0_32, %c0_33] : memref<16x128xf32, #tpu.memory_space<vmem>>, vector<16x128xf32>
      tpu.vector_store %arg9[%c0_32, %c0_33], %44 {strides = array<i32>} : memref<16x128xf32, #tpu.memory_space<vmem>>, vector<16x128xf32>,
      %cst_34 = arith.constant 0.000000e+00 : f32
      %46 = vector.broadcast %cst_34 : f32 to vector<1x1xf32>
      %c0_35 = arith.constant 0 : index
      %c0_36 = arith.constant 0 : index
      %47 = vector.load %arg10[%c0_35, %c0_36] : memref<1x1xf32, #tpu.memory_space<vmem>>, vector<1x1xf32>
      tpu.vector_store %arg10[%c0_35, %c0_36], %46 {strides = array<i32>} : memref<1x1xf32, #tpu.memory_space<vmem>>, vector<1x1xf32>,
    } else {
    }
    %c0 = arith.constant 0 : index
    %c0_1 = arith.constant 0 : index
    %3 = vector.load %arg1[%c0, %c0_1] : memref<8x16xbf16, #tpu.memory_space<vmem>>, vector<8x16xbf16>
    %c0_2 = arith.constant 0 : index
    %c0_3 = arith.constant 0 : index
    %4 = vector.load %arg2[%c0_2, %c0_3] : memref<8x16xbf16, #tpu.memory_space<vmem>>, vector<8x16xbf16>
    %c0_4 = arith.constant 0 : index
    %c0_5 = arith.constant 0 : index
    %5 = vector.load %arg5[%c0_4, %c0_5] : memref<16x128xbf16, #tpu.memory_space<vmem>>, vector<16x128xbf16>
    %cst = arith.constant dense<0.000000e+00> : vector<8x128xf32>
    %6 = tpu.matmul %3, %5, %cst {dimension_numbers = #tpu.dot_dimension_numbers<[1], [0], [0], [1], [0, 0, 1, 1], [], []>} : vector<8x16xbf16>, vector<16x128xbf16>, vector<8x128xf32> -> vector<8x128xf32>
    %c0_6 = arith.constant 0 : index
    %c0_7 = arith.constant 0 : index
    %7 = vector.load %arg6[%c0_6, %c0_7] : memref<128x1xf32, #tpu.memory_space<vmem>>, vector<128x1xf32>
    %cst_8 = arith.constant dense<0.000000e+00> : vector<8x1xf32>
    %8 = tpu.matmul %6, %7, %cst_8 {dimension_numbers = #tpu.dot_dimension_numbers<[1], [0], [0], [1], [0, 0, 1, 1], [], []>} : vector<8x128xf32>, vector<128x1xf32>, vector<8x1xf32> -> vector<8x1xf32>
    %c0_9 = arith.constant 0 : index
    %c0_10 = arith.constant 0 : index
    %9 = vector.load %arg7[%c0_9, %c0_10] : memref<16x1xf32, #tpu.memory_space<vmem>>, vector<16x1xf32>
    %cst_11 = arith.constant dense<0.000000e+00> : vector<8x1xf32>
    %10 = tpu.matmul %4, %9, %cst_11 {dimension_numbers = #tpu.dot_dimension_numbers<[1], [0], [0], [1], [0, 0, 1, 1], [], []>} : vector<8x16xbf16>, vector<16x1xf32>, vector<8x1xf32> -> vector<8x1xf32>
    %11 = arith.addf %8, %10 : vector<8x1xf32>
    %c0_12 = arith.constant 0 : index
    %c0_13 = arith.constant 0 : index
    %12 = vector.load %arg3[%c0_12, %c0_13] : memref<8x1xf32, #tpu.memory_space<vmem>>, vector<8x1xf32>
    %13 = arith.addf %11, %12 : vector<8x1xf32>
    %cst_14 = arith.constant 0.176776692 : f32
    %14 = vector.broadcast %cst_14 : f32 to vector<8x1xf32>
    %15 = arith.mulf %13, %14 : vector<8x1xf32>
    %cst_15 = arith.constant 0.000000e+00 : f32
    %16 = vector.broadcast %cst_15 : f32 to vector<8x1xf32>
    %17 = arith.cmpf oge, %15, %16 : vector<8x1xf32>
    %cst_16 = arith.constant 2.000000e-01 : f32
    %18 = vector.broadcast %cst_16 : f32 to vector<8x1xf32>
    %19 = arith.mulf %18, %15 : vector<8x1xf32>
    %20 = arith.select %17, %15, %19 : vector<8x1xi1>, vector<8x1xf32>
    %cst_17 = arith.constant 0.000000e+00 : f32
    %21 = vector.broadcast %cst_17 : f32 to vector<8x1xf32>
    %22 = arith.subf %21, %20 : vector<8x1xf32>
    %23 = math.exp %22 : vector<8x1xf32>
    %c0_18 = arith.constant 0 : index
    %c0_19 = arith.constant 0 : index
    %24 = vector.load %arg4[%c0_18, %c0_19] : memref<8x1xf32, #tpu.memory_space<vmem>>, vector<8x1xf32>
    %25 = arith.mulf %23, %24 : vector<8x1xf32>
    %c0_20 = arith.constant 0 : index
    %c0_21 = arith.constant 0 : index
    %26 = vector.load %arg10[%c0_20, %c0_21] : memref<1x1xf32, #tpu.memory_space<vmem>>, vector<1x1xf32>
    %27 = vector.shape_cast %25 : vector<8x1xf32> to vector<1x8x1xf32>
    %cst_22 = arith.constant dense<0.000000e+00> : vector<1xf32>
    %28 = vector.multi_reduction <add>, %27, %cst_22 [1, 2] : vector<1x8x1xf32> to vector<1xf32>
    %29 = vector.shape_cast %28 : vector<1xf32> to vector<1x1x1xf32>
    %30 = vector.extract %29[0, 0, 0] : f32 from vector<1x1x1xf32>
    %31 = vector.broadcast %30 : f32 to vector<1x1xf32>
    %32 = arith.addf %26, %31 : vector<1x1xf32>
    %c0_23 = arith.constant 0 : index
    %c0_24 = arith.constant 0 : index
    %33 = vector.load %arg10[%c0_23, %c0_24] : memref<1x1xf32, #tpu.memory_space<vmem>>, vector<1x1xf32>
    tpu.vector_store %arg10[%c0_23, %c0_24], %32 {strides = array<i32>} : memref<1x1xf32, #tpu.memory_space<vmem>>, vector<1x1xf32>,
    %34 = vector.broadcast %25 : vector<8x1xf32> to vector<8x128xf32>
    %35 = arith.mulf %6, %34 : vector<8x128xf32>
    %36 = arith.truncf %35 : vector<8x128xf32> to vector<8x128xbf16>
    %c0_25 = arith.constant 0 : index
    %c0_26 = arith.constant 0 : index
    %37 = vector.load %arg9[%c0_25, %c0_26] : memref<16x128xf32, #tpu.memory_space<vmem>>, vector<16x128xf32>
    %cst_27 = arith.constant dense<0.000000e+00> : vector<16x128xf32>
    %38 = tpu.matmul %4, %36, %cst_27 {dimension_numbers = #tpu.dot_dimension_numbers<[0], [0], [1], [1], [0, 1, 1, 1], [], []>} : vector<8x16xbf16>, vector<8x128xbf16>, vector<16x128xf32> -> vector<16x128xf32>
    %39 = arith.addf %37, %38 : vector<16x128xf32>
    %c0_28 = arith.constant 0 : index
    %c0_29 = arith.constant 0 : index
    %40 = vector.load %arg9[%c0_28, %c0_29] : memref<16x128xf32, #tpu.memory_space<vmem>>, vector<16x128xf32>
    tpu.vector_store %arg9[%c0_28, %c0_29], %39 {strides = array<i32>} : memref<16x128xf32, #tpu.memory_space<vmem>>, vector<16x128xf32>,
    %c2_i32 = arith.constant 2 : i32
    %41 = arith.cmpi eq, %arg0, %c2_i32 : i32
    %42 = arith.extui %41 : i1 to i32
    %c0_i32_30 = arith.constant 0 : i32
    %43 = arith.cmpi ne, %42, %c0_i32_30 : i32
    scf.if %43 {
      %c0_31 = arith.constant 0 : index
      %c0_32 = arith.constant 0 : index
      %44 = vector.load %arg10[%c0_31, %c0_32] : memref<1x1xf32, #tpu.memory_space<vmem>>, vector<1x1xf32>
      %45 = tpu.reciprocal %44 {approx = true} : vector<1x1xf32> -> vector<1x1xf32>
      %c0_33 = arith.constant 0 : index
      %c0_34 = arith.constant 0 : index
      %46 = vector.load %arg9[%c0_33, %c0_34] : memref<16x128xf32, #tpu.memory_space<vmem>>, vector<16x128xf32>
      %47 = vector.broadcast %45 : vector<1x1xf32> to vector<16x128xf32>
      %48 = arith.mulf %46, %47 : vector<16x128xf32>
      %cst_35 = arith.constant 0.000000e+00 : f32
      %49 = vector.broadcast %cst_35 : f32 to vector<16x128xf32>
      %50 = arith.cmpf oge, %48, %49 : vector<16x128xf32>
      %cst_36 = arith.constant 2.000000e-01 : f32
      %51 = vector.broadcast %cst_36 : f32 to vector<16x128xf32>
      %52 = arith.mulf %51, %48 : vector<16x128xf32>
      %53 = arith.select %50, %48, %52 : vector<16x128xi1>, vector<16x128xf32>
      %c0_37 = arith.constant 0 : index
      %c0_38 = arith.constant 0 : index
      %54 = vector.load %arg8[%c0_37, %c0_38] : memref<16x128xf32, #tpu.memory_space<vmem>>, vector<16x128xf32>
      tpu.vector_store %arg8[%c0_37, %c0_38], %53 {strides = array<i32>} : memref<16x128xf32, #tpu.memory_space<vmem>>, vector<16x128xf32>,
    } else {
    }
    return
  }
  func.func @transform_0(%arg0: i32) -> (i32, i32) {
    %c0_i32 = arith.constant 0 : i32
    %c0_i32_0 = arith.constant 0 : i32
    return %arg0, %c0_i32 : i32, i32
  }
  func.func @transform_1(%arg0: i32) -> (i32, i32) {
    %c0_i32 = arith.constant 0 : i32
    %c0_i32_0 = arith.constant 0 : i32
    return %arg0, %c0_i32 : i32, i32
  }
  func.func @transform_2(%arg0: i32) -> (i32, i32) {
    %c0_i32 = arith.constant 0 : i32
    %c0_i32_0 = arith.constant 0 : i32
    return %arg0, %c0_i32 : i32, i32
  }
  func.func @transform_3(%arg0: i32) -> (i32, i32) {
    %c0_i32 = arith.constant 0 : i32
    %c0_i32_0 = arith.constant 0 : i32
    return %arg0, %c0_i32 : i32, i32
  }
  func.func @transform_4(%arg0: i32) -> (i32, i32) {
    %c0_i32 = arith.constant 0 : i32
    %c0_i32_0 = arith.constant 0 : i32
    %c0_i32_1 = arith.constant 0 : i32
    return %c0_i32, %c0_i32_0 : i32, i32
  }
  func.func @transform_5(%arg0: i32) -> (i32, i32) {
    %c0_i32 = arith.constant 0 : i32
    %c0_i32_0 = arith.constant 0 : i32
    %c0_i32_1 = arith.constant 0 : i32
    return %c0_i32, %c0_i32_0 : i32, i32
  }
  func.func @transform_6(%arg0: i32) -> (i32, i32) {
    %c0_i32 = arith.constant 0 : i32
    %c0_i32_0 = arith.constant 0 : i32
    %c0_i32_1 = arith.constant 0 : i32
    return %c0_i32, %c0_i32_0 : i32, i32
  }
  func.func @transform_7(%arg0: i32) -> (i32, i32) {
    %c0_i32 = arith.constant 0 : i32
    %c0_i32_0 = arith.constant 0 : i32
    %c0_i32_1 = arith.constant 0 : i32
    return %c0_i32, %c0_i32_0 : i32, i32
  }
}

</mosaic_0001>

<llo_original>
// kernel: tgnn_forward.4
$region0: #{tgnn_forward.4}
  #allocation0 [shape = 'u32[]', space=smem, size = 0x4, offset = 0x4, fixed_abs, tag = 'smem constant byte address 0x4 - core index']
  #allocation1 [shape = 'u32[144,128]{1,0:T(1,128)}', space=vmem, size = 0x12000, scoped, tag = 'internal scratch']
  %s0 = inlined_call_operand.vmem [shape: f32[16,128], index: 0, kind: input, shape index: {}]
  %s1 = inlined_call_operand.vmem [shape: f32[128,128], index: 1, kind: input, shape index: {}]
  %s2 = inlined_call_operand.vmem [shape: f32[128,1], index: 2, kind: input, shape index: {}]
  %s3 = inlined_call_operand.vmem [shape: bf16[16,128], index: 3, kind: output, shape index: {0}]
  %s4 = inlined_call_operand.vmem [shape: f32[16,1], index: 4, kind: output, shape index: {1}]
  %5 = xla_tuple %s3, %s4
  %s6 = sld [smem:[#allocation0]]
  $region30: #{tgnn_forward.4} parent=0
    _
  %s8 = ssub.s32 1, %s6
  %s9 = scalar_select 0, %s8, %s6
  // Predicated region
  $region2: #{tgnn_forward.4} parent=0 // pred_check
    _
  $region3: #{tgnn_forward.4} parent=0 // pred_check_branch
    %11 = sbr.rel (0) target = $region5
  $region4: #{tgnn_forward.4} parent=0 // pred_region
    _
  $region5: #{tgnn_forward.4} parent=0 // pred_fallthru
    _
  // Predicated region
  $region6: #{tgnn_forward.4} parent=0 // pred_check
    _
  $region7: #{tgnn_forward.4} parent=0 // pred_check_branch
    %13 = sbr.rel (0) target = $region9
  $region8: #{tgnn_forward.4} parent=0 // pred_region
    _
  $region9: #{tgnn_forward.4} parent=0 // pred_fallthru
    _
  // Predicated region
  $region10: #{tgnn_forward.4} parent=0 // pred_check
    _
  $region11: #{tgnn_forward.4} parent=0 // pred_check_branch
    %15 = sbr.rel (0) target = $region13
  $region12: #{tgnn_forward.4} parent=0 // pred_region
    _
  $region13: #{tgnn_forward.4} parent=0 // pred_fallthru
    _
  %v16 = vld [vmem:[%s0] sm:$0xff]
  %v17 = vld [vmem:[%s0 + $0x8] sm:$0xff]
  %v18 = vld [vmem:[%s1] sm:$0xff]
  %v19 = vld [vmem:[%s1 + $0x8] sm:$0xff]
  %v20 = vld [vmem:[%s1 + $0x10] sm:$0xff]
  %v21 = vld [vmem:[%s1 + $0x18] sm:$0xff]
  %v22 = vld [vmem:[%s1 + $0x20] sm:$0xff]
  %v23 = vld [vmem:[%s1 + $0x28] sm:$0xff]
  %v24 = vld [vmem:[%s1 + $0x30] sm:$0xff]
  %v25 = vld [vmem:[%s1 + $0x38] sm:$0xff]
  %v26 = vld [vmem:[%s1 + $0x40] sm:$0xff]
  %v27 = vld [vmem:[%s1 + $0x48] sm:$0xff]
  %v28 = vld [vmem:[%s1 + $0x50] sm:$0xff]
  %v29 = vld [vmem:[%s1 + $0x58] sm:$0xff]
  %v30 = vld [vmem:[%s1 + $0x60] sm:$0xff]
  %v31 = vld [vmem:[%s1 + $0x68] sm:$0xff]
  %v32 = vld [vmem:[%s1 + $0x70] sm:$0xff]
  %v33 = vld [vmem:[%s1 + $0x78] sm:$0xff]
  %34 = vmatprep.subr.mxu0 0.0
  %35 = vmatpush1.msra.mxu0 %v18
  %36 = vmatprep.subr.mxu0 0.0
  %37 = vmatpush1.msra.mxu0 %v19
  %38 = vmatprep.subr.mxu0 0.0
  %39 = vmatpush1.msra.mxu0 %v20
  %40 = vmatprep.subr.mxu0 0.0
  %41 = vmatpush1.msra.mxu0 %v21
  %42 = vmatprep.subr.mxu0 0.0
  %43 = vmatpush1.msra.mxu0 %v22
  %44 = vmatprep.subr.mxu0 0.0
  %45 = vmatpush1.msra.mxu0 %v23
  %46 = vmatprep.subr.mxu0 0.0
  %47 = vmatpush1.msra.mxu0 %v24
  %48 = vmatprep.subr.mxu0 0.0
  %49 = vmatpush1.msra.mxu0 %v25
  %50 = vmatprep.subr.mxu0 0.0
  %51 = vmatpush1.msra.mxu0 %v26
  %52 = vmatprep.subr.mxu0 0.0
  %53 = vmatpush1.msra.mxu0 %v27
  %54 = vmatprep.subr.mxu0 0.0
  %55 = vmatpush1.msra.mxu0 %v28
  %56 = vmatprep.subr.mxu0 0.0
  %57 = vmatpush1.msra.mxu0 %v29
  %58 = vmatprep.subr.mxu0 0.0
  %59 = vmatpush1.msra.mxu0 %v30
  %60 = vmatprep.subr.mxu0 0.0
  %61 = vmatpush1.msra.mxu0 %v31
  %62 = vmatprep.subr.mxu0 0.0
  %63 = vmatpush1.msra.mxu0 %v32
  %64 = vmatprep.subr.mxu0 0.0
  %65 = vmatpush1.msra.mxu0 %v33
  %66 = vmatprep.subr.mxu0 0.0
  %67 = vmatpush1.msra.mxu0 0.0
  %68 = vmatprep.subr.mxu0 0.0
  %69 = vmatpush1.msra.mxu0 0.0
  %70 = vmatprep.subr.mxu0 0.0
  %71 = vmatpush1.msra.mxu0 0.0
  %72 = vmatprep.subr.mxu0 0.0
  %73 = vmatpush1.msra.mxu0 0.0
  %74 = vmatprep.subr.mxu0 0.0
  %75 = vmatpush1.msra.mxu0 0.0
  %76 = vmatprep.subr.mxu0 0.0
  %77 = vmatpush1.msra.mxu0 0.0
  %78 = vmatprep.subr.mxu0 0.0
  %79 = vmatpush1.msra.mxu0 0.0
  %80 = vmatprep.subr.mxu0 0.0
  %81 = vmatpush1.msra.mxu0 0.0
  %82 = vmatprep.subr.mxu0 0.0
  %83 = vmatpush1.msra.mxu0 0.0
  %84 = vmatprep.subr.mxu0 0.0
  %85 = vmatpush1.msra.mxu0 0.0
  %86 = vmatprep.subr.mxu0 0.0
  %87 = vmatpush1.msra.mxu0 0.0
  %88 = vmatprep.subr.mxu0 0.0
  %89 = vmatpush1.msra.mxu0 0.0
  %90 = vmatprep.subr.mxu0 0.0
  %91 = vmatpush1.msra.mxu0 0.0
  %92 = vmatprep.subr.mxu0 0.0
  %93 = vmatpush1.msra.mxu0 0.0
  %94 = vmatprep.subr.mxu0 0.0
  %95 = vmatpush1.msra.mxu0 0.0
  %96 = vmatprep.subr.mxu0 0.0
  %97 = vmatpush1.msra.mxu0 0.0
  %98 = vmatprep.mubr.f32.mxu0 0.0
  %99 = vmatmul.mubr.f32.gmra.mrb[0].mxu0 %v16
  %v100 = vpop.f32.mrb[0].mxu0
  %v101 = vadd.f32 0.0, %v100
  %v102 = vpop.f32.mrb[0].mxu0
  %103 = vmatprep.mubr.f32.mxu0 0.0
  %104 = vmatmul.mubr.f32.gmra.mrb[0].mxu0 %v17
  %v105 = vpop.f32.mrb[0].mxu0
  %v106 = vadd.f32 0.0, %v105
  %v107 = vpop.f32.mrb[0].mxu0
  %108 = vdwg.mxu0
  %v109 = vpack.c.bf16 %v106, %v101
  %v111 = vunpack.c.l.b16 %v109
  %v112 = vunpack.c.h.b16 %v109
  %v113 = vpack.c.b16 %v111, %v111
  %v114 = vpack.c.b16 %v112, %v112
  %117 = vst [vmem:[%s3] sm:$0xf] %v113
  %118 = vst [vmem:[%s3 + $0x4] sm:$0xf] %v114
  %v119 = vld [vmem:[%s2] sm:$0xff]
  %v120 = vld [vmem:[%s2 + $0x8] sm:$0xff]
  %v121 = vld [vmem:[%s2 + $0x10] sm:$0xff]
  %v122 = vld [vmem:[%s2 + $0x18] sm:$0xff]
  %v123 = vld [vmem:[%s2 + $0x20] sm:$0xff]
  %v124 = vld [vmem:[%s2 + $0x28] sm:$0xff]
  %v125 = vld [vmem:[%s2 + $0x30] sm:$0xff]
  %v126 = vld [vmem:[%s2 + $0x38] sm:$0xff]
  %v127 = vld [vmem:[%s2 + $0x40] sm:$0xff]
  %v128 = vld [vmem:[%s2 + $0x48] sm:$0xff]
  %v129 = vld [vmem:[%s2 + $0x50] sm:$0xff]
  %v130 = vld [vmem:[%s2 + $0x58] sm:$0xff]
  %v131 = vld [vmem:[%s2 + $0x60] sm:$0xff]
  %v132 = vld [vmem:[%s2 + $0x68] sm:$0xff]
  %v133 = vld [vmem:[%s2 + $0x70] sm:$0xff]
  %v134 = vld [vmem:[%s2 + $0x78] sm:$0xff]
  %135 = vmatprep.subr.mxu0 0.0
  %136 = vmatpush1.msra.mxu0 %v119
  %137 = vmatprep.subr.mxu0 0.0
  %138 = vmatpush1.msra.mxu0 %v120
  %139 = vmatprep.subr.mxu0 0.0
  %140 = vmatpush1.msra.mxu0 %v121
  %141 = vmatprep.subr.mxu0 0.0
  %142 = vmatpush1.msra.mxu0 %v122
  %143 = vmatprep.subr.mxu0 0.0
  %144 = vmatpush1.msra.mxu0 %v123
  %145 = vmatprep.subr.mxu0 0.0
  %146 = vmatpush1.msra.mxu0 %v124
  %147 = vmatprep.subr.mxu0 0.0
  %148 = vmatpush1.msra.mxu0 %v125
  %149 = vmatprep.subr.mxu0 0.0
  %150 = vmatpush1.msra.mxu0 %v126
  %151 = vmatprep.subr.mxu0 0.0
  %152 = vmatpush1.msra.mxu0 %v127
  %153 = vmatprep.subr.mxu0 0.0
  %154 = vmatpush1.msra.mxu0 %v128
  %155 = vmatprep.subr.mxu0 0.0
  %156 = vmatpush1.msra.mxu0 %v129
  %157 = vmatprep.subr.mxu0 0.0
  %158 = vmatpush1.msra.mxu0 %v130
  %159 = vmatprep.subr.mxu0 0.0
  %160 = vmatpush1.msra.mxu0 %v131
  %161 = vmatprep.subr.mxu0 0.0
  %162 = vmatpush1.msra.mxu0 %v132
  %163 = vmatprep.subr.mxu0 0.0
  %164 = vmatpush1.msra.mxu0 %v133
  %165 = vmatprep.subr.mxu0 0.0
  %166 = vmatpush1.msra.mxu0 %v134
  %167 = vmatprep.subr.mxu0 0.0
  %168 = vmatpush1.msra.mxu0 0.0
  %169 = vmatprep.subr.mxu0 0.0
  %170 = vmatpush1.msra.mxu0 0.0
  %171 = vmatprep.subr.mxu0 0.0
  %172 = vmatpush1.msra.mxu0 0.0
  %173 = vmatprep.subr.mxu0 0.0
  %174 = vmatpush1.msra.mxu0 0.0
  %175 = vmatprep.subr.mxu0 0.0
  %176 = vmatpush1.msra.mxu0 0.0
  %177 = vmatprep.subr.mxu0 0.0
  %178 = vmatpush1.msra.mxu0 0.0
  %179 = vmatprep.subr.mxu0 0.0
  %180 = vmatpush1.msra.mxu0 0.0
  %181 = vmatprep.subr.mxu0 0.0
  %182 = vmatpush1.msra.mxu0 0.0
  %183 = vmatprep.subr.mxu0 0.0
  %184 = vmatpush1.msra.mxu0 0.0
  %185 = vmatprep.subr.mxu0 0.0
  %186 = vmatpush1.msra.mxu0 0.0
  %187 = vmatprep.subr.mxu0 0.0
  %188 = vmatpush1.msra.mxu0 0.0
  %189 = vmatprep.subr.mxu0 0.0
  %190 = vmatpush1.msra.mxu0 0.0
  %191 = vmatprep.subr.mxu0 0.0
  %192 = vmatpush1.msra.mxu0 0.0
  %193 = vmatprep.subr.mxu0 0.0
  %194 = vmatpush1.msra.mxu0 0.0
  %195 = vmatprep.subr.mxu0 0.0
  %196 = vmatpush1.msra.mxu0 0.0
  %197 = vmatprep.subr.mxu0 0.0
  %198 = vmatpush1.msra.mxu0 0.0
  %199 = vmatprep.mubr.f32.mxu0 0.0
  %200 = vmatmul.mubr.f32.gmra.mrb[0].mxu0 %v101
  %v201 = vpop.f32.mrb[0].mxu0
  %v202 = vadd.f32 0.0, %v201
  %v203 = vpop.f32.mrb[0].mxu0
  %204 = vmatprep.mubr.f32.mxu0 0.0
  %205 = vmatmul.mubr.f32.gmra.mrb[0].mxu0 %v106
  %v206 = vpop.f32.mrb[0].mxu0
  %v207 = vadd.f32 0.0, %v206
  %v208 = vpop.f32.mrb[0].mxu0
  %209 = vdwg.mxu0
  %vm210 = vcmask 7168
  %211 = vst.msk [vmem:[%s4] sm:$0xff] %vm210, %v202
  %212 = vst.msk [vmem:[%s4 + $0x8] sm:$0xff] %vm210, %v207
  // Predicated region
  $region14: #{tgnn_forward.4} parent=0 // pred_check
    _
  $region15: #{tgnn_forward.4} parent=0 // pred_check_branch
    %214 = sbr.rel (0) target = $region17
  $region16: #{tgnn_forward.4} parent=0 // pred_region
    _
  $region17: #{tgnn_forward.4} parent=0 // pred_fallthru
    _
  // Predicated region
  $region18: #{tgnn_forward.4} parent=0 // pred_check
    _
  $region19: #{tgnn_forward.4} parent=0 // pred_check_branch
    %216 = sbr.rel (0) target = $region21
  $region20: #{tgnn_forward.4} parent=0 // pred_region
    _
  $region21: #{tgnn_forward.4} parent=0 // pred_fallthru
    _
  // Predicated region
  $region22: #{tgnn_forward.4} parent=0 // pred_check
    _
  $region23: #{tgnn_forward.4} parent=0 // pred_check_branch
    %218 = sbr.rel (0) target = $region25
  $region24: #{tgnn_forward.4} parent=0 // pred_region
    _
  $region25: #{tgnn_forward.4} parent=0 // pred_fallthru
    _
  // Predicated region
  $region26: #{tgnn_forward.4} parent=0 // pred_check
    _
  $region27: #{tgnn_forward.4} parent=0 // pred_check_branch
    %220 = sbr.rel (0) target = $region29
  $region28: #{tgnn_forward.4} parent=0 // pred_region
    _
  $region29: #{tgnn_forward.4} parent=0 // pred_fallthru
    _

// kernel: tgnn_forward.5
$region0: #{tgnn_forward.5}
  #allocation0 [shape = 'u32[]', space=smem, size = 0x4, offset = 0x4, fixed_abs, tag = 'smem constant byte address 0x4 - core index']
  #allocation1 [shape = 'u32[144,128]{1,0:T(1,128)}', space=vmem, size = 0x12000, scoped, tag = 'internal scratch']
  #allocation2 [shape = 'f32[16,128]{1,0:T(8,128)}', space=vmem, size = 0x2000, scoped, tag = 'scratch operand']
  #allocation3 [shape = 'f32[1,1]{1,0:T(1,128)}', space=vmem, size = 0x200, scoped, tag = 'scratch operand']
  %s0 = inlined_call_operand.vmem [shape: bf16[24,16], index: 0, kind: input, shape index: {}]
  %s1 = inlined_call_operand.vmem [shape: bf16[24,16], index: 1, kind: input, shape index: {}]
  %s2 = inlined_call_operand.vmem [shape: f32[24,1], index: 2, kind: input, shape index: {}]
  %s3 = inlined_call_operand.vmem [shape: f32[24,1], index: 3, kind: input, shape index: {}]
  %s4 = inlined_call_operand.vmem [shape: bf16[16,128], index: 4, kind: input, shape index: {}]
  %s5 = inlined_call_operand.vmem [shape: f32[128,1], index: 5, kind: input, shape index: {}]
  %s6 = inlined_call_operand.vmem [shape: f32[16,1], index: 6, kind: input, shape index: {}]
  %s7 = inlined_call_operand.vmem [shape: f32[16,128], index: 7, kind: output, shape index: {}]
  %s8 = sld [smem:[#allocation0]]
  $region69: #{tgnn_forward.5} parent=0
    _
  %s10 = ssub.s32 1, %s8
  %s11 = scalar_select 0, %s10, %s8
  loop: start=0, step=1, limit=5
  $region2: #{tgnn_forward.5} parent=0 // loop_pre_header
    _
  $region3: #{tgnn_forward.5} parent=0 // loop_header
    %s13 = sphi 0, %s17
    %p14 = scmp.ge.s32.totalorder %s13, 5
    %s23 = sphi 0, %s25
    %s26 = sphi 0, %s23
    %s27 = sphi 0, %s26
    %s43 = sphi 0, %s27
    %s49 = sphi 0, %s51
    %s52 = sphi 0, %s49
    %s53 = sphi 0, %s52
    %s69 = sphi 0, %s53
    %s75 = sphi 0, %s77
    %s78 = sphi 0, %s75
    %s79 = sphi 0, %s78
    %s95 = sphi 0, %s79
    %s101 = sphi 0, %s103
    %s104 = sphi 0, %s101
    %s105 = sphi 0, %s104
    %s121 = sphi 0, %s105
    %s125 = sphi 0, %s125
    %s127 = sphi 0, %s125
    %s128 = sphi 0, %s127
    %s142 = sphi 0, %s128
    %s146 = sphi 0, %s146
    %s148 = sphi 0, %s146
    %s149 = sphi 0, %s148
    %s163 = sphi 0, %s149
    %s167 = sphi 0, %s167
    %s169 = sphi 0, %s167
    %s170 = sphi 0, %s169
    %s184 = sphi 0, %s170
    %s188 = sphi 0, %s188
    %s190 = sphi 0, %s188
    %s191 = sphi 0, %s190
    %s205 = sphi 0, %s191
  $region4: #{tgnn_forward.5} parent=0 // loop_header_branch
    %16 = sbr.rel (%p14) target = $region8
  $region5: #{tgnn_forward.5} parent=0 // loop_body
    %s18 = ssub.s32 %s13, 1
    %s19 = ssub.s32 %s13, 2
    %s20 = sadd.s32 %s13, 1
    %s21 = ssub.s32 %s13, %s20
    %p22 = scmp.eq.s32.totalorder %s21, 0
    %s24 = sadd.s32 %s23, 1
    %s25 = scalar_select %p22, %s23, %s24
    %p28 = pneg %p22
    %p29 = scmp.eq.s32.totalorder %s13, 2
    %p30 = por %p28, %p29
    %p31 = scmp.ne.s32.totalorder %s23, %s26
    %p32 = scmp.eq.s32.totalorder %s13, 0
    %p33 = por %p31, %p32
    %p34 = scmp.ne.s32.totalorder %s23, %s26
    %p35 = scmp.eq.s32.totalorder %s18, 2
    %p36 = por %p34, %p35
    %p37 = scmp.ne.s32.totalorder %s26, %s27
    %p38 = scmp.eq.s32.totalorder %s18, 0
    %p39 = por %p37, %p38
    %p40 = scmp.ne.s32.totalorder %s26, %s27
    %p41 = scmp.eq.s32.totalorder %s19, 2
    %p42 = por %p40, %p41
    %p44 = scmp.ne.s32.totalorder %s27, %s43
    %p45 = scmp.eq.s32.totalorder %s19, 0
    %p46 = por %p44, %p45
    %s47 = ssub.s32 %s13, %s20
    %p48 = scmp.eq.s32.totalorder %s47, 0
    %s50 = sadd.s32 %s49, 1
    %s51 = scalar_select %p48, %s49, %s50
    %p54 = pneg %p48
    %p55 = scmp.eq.s32.totalorder %s13, 2
    %p56 = por %p54, %p55
    %p57 = scmp.ne.s32.totalorder %s49, %s52
    %p58 = scmp.eq.s32.totalorder %s13, 0
    %p59 = por %p57, %p58
    %p60 = scmp.ne.s32.totalorder %s49, %s52
    %p61 = scmp.eq.s32.totalorder %s18, 2
    %p62 = por %p60, %p61
    %p63 = scmp.ne.s32.totalorder %s52, %s53
    %p64 = scmp.eq.s32.totalorder %s18, 0
    %p65 = por %p63, %p64
    %p66 = scmp.ne.s32.totalorder %s52, %s53
    %p67 = scmp.eq.s32.totalorder %s19, 2
    %p68 = por %p66, %p67
    %p70 = scmp.ne.s32.totalorder %s53, %s69
    %p71 = scmp.eq.s32.totalorder %s19, 0
    %p72 = por %p70, %p71
    %s73 = ssub.s32 %s13, %s20
    %p74 = scmp.eq.s32.totalorder %s73, 0
    %s76 = sadd.s32 %s75, 1
    %s77 = scalar_select %p74, %s75, %s76
    %p80 = pneg %p74
    %p81 = scmp.eq.s32.totalorder %s13, 2
    %p82 = por %p80, %p81
    %p83 = scmp.ne.s32.totalorder %s75, %s78
    %p84 = scmp.eq.s32.totalorder %s13, 0
    %p85 = por %p83, %p84
    %p86 = scmp.ne.s32.totalorder %s75, %s78
    %p87 = scmp.eq.s32.totalorder %s18, 2
    %p88 = por %p86, %p87
    %p89 = scmp.ne.s32.totalorder %s78, %s79
    %p90 = scmp.eq.s32.totalorder %s18, 0
    %p91 = por %p89, %p90
    %p92 = scmp.ne.s32.totalorder %s78, %s79
    %p93 = scmp.eq.s32.totalorder %s19, 2
    %p94 = por %p92, %p93
    %p96 = scmp.ne.s32.totalorder %s79, %s95
    %p97 = scmp.eq.s32.totalorder %s19, 0
    %p98 = por %p96, %p97
    %s99 = ssub.s32 %s13, %s20
    %p100 = scmp.eq.s32.totalorder %s99, 0
    %s102 = sadd.s32 %s101, 1
    %s103 = scalar_select %p100, %s101, %s102
    %p106 = pneg %p100
    %p107 = scmp.eq.s32.totalorder %s13, 2
    %p108 = por %p106, %p107
    %p109 = scmp.ne.s32.totalorder %s101, %s104
    %p110 = scmp.eq.s32.totalorder %s13, 0
    %p111 = por %p109, %p110
    %p112 = scmp.ne.s32.totalorder %s101, %s104
    %p113 = scmp.eq.s32.totalorder %s18, 2
    %p114 = por %p112, %p113
    %p115 = scmp.ne.s32.totalorder %s104, %s105
    %p116 = scmp.eq.s32.totalorder %s18, 0
    %p117 = por %p115, %p116
    %p118 = scmp.ne.s32.totalorder %s104, %s105
    %p119 = scmp.eq.s32.totalorder %s19, 2
    %p120 = por %p118, %p119
    %p122 = scmp.ne.s32.totalorder %s105, %s121
    %p123 = scmp.eq.s32.totalorder %s19, 0
    %p124 = por %p122, %p123
    %s126 = sadd.s32 %s125, 1
    %p129 = scmp.eq.s32.totalorder %s13, 2
    %p130 = scmp.ne.s32.totalorder %s125, %s127
    %p131 = scmp.eq.s32.totalorder %s13, 0
    %p132 = por %p130, %p131
    %p133 = scmp.ne.s32.totalorder %s125, %s127
    %p134 = scmp.eq.s32.totalorder %s18, 2
    %p135 = por %p133, %p134
    %p136 = scmp.ne.s32.totalorder %s127, %s128
    %p137 = scmp.eq.s32.totalorder %s18, 0
    %p138 = por %p136, %p137
    %p139 = scmp.ne.s32.totalorder %s127, %s128
    %p140 = scmp.eq.s32.totalorder %s19, 2
    %p141 = por %p139, %p140
    %p143 = scmp.ne.s32.totalorder %s128, %s142
    %p144 = scmp.eq.s32.totalorder %s19, 0
    %p145 = por %p143, %p144
    %s147 = sadd.s32 %s146, 1
    %p150 = scmp.eq.s32.totalorder %s13, 2
    %p151 = scmp.ne.s32.totalorder %s146, %s148
    %p152 = scmp.eq.s32.totalorder %s13, 0
    %p153 = por %p151, %p152
    %p154 = scmp.ne.s32.totalorder %s146, %s148
    %p155 = scmp.eq.s32.totalorder %s18, 2
    %p156 = por %p154, %p155
    %p157 = scmp.ne.s32.totalorder %s148, %s149
    %p158 = scmp.eq.s32.totalorder %s18, 0
    %p159 = por %p157, %p158
    %p160 = scmp.ne.s32.totalorder %s148, %s149
    %p161 = scmp.eq.s32.totalorder %s19, 2
    %p162 = por %p160, %p161
    %p164 = scmp.ne.s32.totalorder %s149, %s163
    %p165 = scmp.eq.s32.totalorder %s19, 0
    %p166 = por %p164, %p165
    %s168 = sadd.s32 %s167, 1
    %p171 = scmp.eq.s32.totalorder %s13, 2
    %p172 = scmp.ne.s32.totalorder %s167, %s169
    %p173 = scmp.eq.s32.totalorder %s13, 0
    %p174 = por %p172, %p173
    %p175 = scmp.ne.s32.totalorder %s167, %s169
    %p176 = scmp.eq.s32.totalorder %s18, 2
    %p177 = por %p175, %p176
    %p178 = scmp.ne.s32.totalorder %s169, %s170
    %p179 = scmp.eq.s32.totalorder %s18, 0
    %p180 = por %p178, %p179
    %p181 = scmp.ne.s32.totalorder %s169, %s170
    %p182 = scmp.eq.s32.totalorder %s19, 2
    %p183 = por %p181, %p182
    %p185 = scmp.ne.s32.totalorder %s170, %s184
    %p186 = scmp.eq.s32.totalorder %s19, 0
    %p187 = por %p185, %p186
    %s189 = sadd.s32 %s188, 1
    %p192 = scmp.eq.s32.totalorder %s13, 2
    %p193 = scmp.ne.s32.totalorder %s188, %s190
    %p194 = scmp.eq.s32.totalorder %s13, 0
    %p195 = por %p193, %p194
    %p196 = scmp.ne.s32.totalorder %s188, %s190
    %p197 = scmp.eq.s32.totalorder %s18, 2
    %p198 = por %p196, %p197
    %p199 = scmp.ne.s32.totalorder %s190, %s191
    %p200 = scmp.eq.s32.totalorder %s18, 0
    %p201 = por %p199, %p200
    %p202 = scmp.ne.s32.totalorder %s190, %s191
    %p203 = scmp.eq.s32.totalorder %s19, 2
    %p204 = por %p202, %p203
    %p206 = scmp.ne.s32.totalorder %s191, %s205
    %p207 = scmp.eq.s32.totalorder %s19, 0
    %p208 = por %p206, %p207
    %p209 = scmp.le.s32.totalorder 1, %s13
    %p210 = scmp.lt.s32.totalorder %s13, 4
    %p211 = pnand %p209, %p210
    %p212 = pneg %p211
    // Predicated region
    $region9: #{tgnn_forward.5} parent=5 // pred_check
      _
    $region10: #{tgnn_forward.5} parent=5 // pred_check_branch
      %214 = sbr.rel (%p211) target = $region12
    $region11: #{tgnn_forward.5} parent=5 // pred_region
      %s215 = ssub.s32 %s13, 1
      // Predicated region
      $region13: #{tgnn_forward.5} parent=11 // pred_check
        %p216 = pneg %p138
      $region14: #{tgnn_forward.5} parent=11 // pred_check_branch
        %218 = sbr.rel (%p216) target = $region16
      $region15: #{tgnn_forward.5} parent=11 // pred_region
        _
      $region16: #{tgnn_forward.5} parent=11 // pred_fallthru
        _
      // Predicated region
      $region17: #{tgnn_forward.5} parent=11 // pred_check
        %p219 = pneg %p159
      $region18: #{tgnn_forward.5} parent=11 // pred_check_branch
        %221 = sbr.rel (%p219) target = $region20
      $region19: #{tgnn_forward.5} parent=11 // pred_region
        _
      $region20: #{tgnn_forward.5} parent=11 // pred_fallthru
        _
      // Predicated region
      $region21: #{tgnn_forward.5} parent=11 // pred_check
        %p222 = pneg %p180
      $region22: #{tgnn_forward.5} parent=11 // pred_check_branch
        %224 = sbr.rel (%p222) target = $region24
      $region23: #{tgnn_forward.5} parent=11 // pred_region
        _
      $region24: #{tgnn_forward.5} parent=11 // pred_fallthru
        _
    $region12: #{tgnn_forward.5} parent=5 // pred_fallthru
      _
    %p225 = scmp.lt.s32.totalorder %s13, 3
    // Predicated region
    $region25: #{tgnn_forward.5} parent=5 // pred_check
      %p226 = pneg %p225
    $region26: #{tgnn_forward.5} parent=5 // pred_check_branch
      %228 = sbr.rel (%p226) target = $region28
    $region27: #{tgnn_forward.5} parent=5 // pred_region
      // Predicated region
      $region29: #{tgnn_forward.5} parent=27 // pred_check
        %p229 = pneg %p33
      $region30: #{tgnn_forward.5} parent=27 // pred_check_branch
        %231 = sbr.rel (%p229) target = $region32
      $region31: #{tgnn_forward.5} parent=27 // pred_region
        %p232 = scmp.lt.s32.totalorder %s13, 2
        %s233 = scalar_select %p232, %s13, 2
        %s234 = smul.addr %s233, 4
        %s235 = scalar_lea.vmem %s0, %s234
      $region32: #{tgnn_forward.5} parent=27 // pred_fallthru
        _
      // Predicated region
      $region33: #{tgnn_forward.5} parent=27 // pred_check
        %p236 = pneg %p59
      $region34: #{tgnn_forward.5} parent=27 // pred_check_branch
        %238 = sbr.rel (%p236) target = $region36
      $region35: #{tgnn_forward.5} parent=27 // pred_region
        %p239 = scmp.lt.s32.totalorder %s13, 2
        %s240 = scalar_select %p239, %s13, 2
        %s241 = smul.addr %s240, 4
        %s242 = scalar_lea.vmem %s1, %s241
      $region36: #{tgnn_forward.5} parent=27 // pred_fallthru
        _
      // Predicated region
      $region37: #{tgnn_forward.5} parent=27 // pred_check
        %p243 = pneg %p85
      $region38: #{tgnn_forward.5} parent=27 // pred_check_branch
        %245 = sbr.rel (%p243) target = $region40
      $region39: #{tgnn_forward.5} parent=27 // pred_region
        %p246 = scmp.lt.s32.totalorder %s13, 2
        %s247 = scalar_select %p246, %s13, 2
        %s248 = smul.addr %s247, 8
        %s249 = scalar_lea.vmem %s2, %s248
      $region40: #{tgnn_forward.5} parent=27 // pred_fallthru
        _
      // Predicated region
      $region41: #{tgnn_forward.5} parent=27 // pred_check
        %p250 = pneg %p111
      $region42: #{tgnn_forward.5} parent=27 // pred_check_branch
        %252 = sbr.rel (%p250) target = $region44
      $region43: #{tgnn_forward.5} parent=27 // pred_region
        %p253 = scmp.lt.s32.totalorder %s13, 2
        %s254 = scalar_select %p253, %s13, 2
        %s255 = smul.addr %s254, 8
        %s256 = scalar_lea.vmem %s3, %s255
      $region44: #{tgnn_forward.5} parent=27 // pred_fallthru
        _
    $region28: #{tgnn_forward.5} parent=5 // pred_fallthru
      _
    %p257 = scmp.le.s32.totalorder 1, %s13
    %p258 = scmp.lt.s32.totalorder %s13, 4
    %p259 = pnand %p257, %p258
    %p260 = pneg %p259
    // Predicated region
    $region45: #{tgnn_forward.5} parent=5 // pred_check
      _
    $region46: #{tgnn_forward.5} parent=5 // pred_check_branch
      %262 = sbr.rel (%p259) target = $region48
    $region47: #{tgnn_forward.5} parent=5 // pred_region
      %s263 = ssub.s32 %s13, 1
      %p264 = scmp.lt.s32.totalorder %s18, 2
      %s265 = scalar_select %p264, %s18, 2
      %s266 = smul.addr %s265, 4
      %s267 = scalar_lea.vmem %s0, %s266
      %p268 = pneg %p39
      %p269 = pneg %p36
      %p270 = scmp.lt.s32.totalorder %s18, 2
      %s271 = scalar_select %p270, %s18, 2
      %s272 = smul.addr %s271, 4
      %s273 = scalar_lea.vmem %s1, %s272
      %p274 = pneg %p65
      %p275 = pneg %p62
      %p276 = scmp.lt.s32.totalorder %s18, 2
      %s277 = scalar_select %p276, %s18, 2
      %s278 = smul.addr %s277, 8
      %s279 = scalar_lea.vmem %s2, %s278
      %p280 = pneg %p91
      %p281 = pneg %p88
      %p282 = scmp.lt.s32.totalorder %s18, 2
      %s283 = scalar_select %p282, %s18, 2
      %s284 = smul.addr %s283, 8
      %s285 = scalar_lea.vmem %s3, %s284
      %p286 = pneg %p117
      %p287 = pneg %p114
      %p288 = pneg %p138
      %p289 = pneg %p135
      %p290 = pneg %p159
      %p291 = pneg %p156
      %p292 = pneg %p180
      %p293 = pneg %p177
      %p294 = pneg %p201
      %p295 = pneg %p198
      %p296 = scmp.lt.s32.totalorder %s18, 2
      %s297 = scalar_select %p296, %s18, 2
      %s298 = smul.addr %s297, 4
      %s299 = scalar_lea.vmem %s0, %s298
      %p300 = scmp.lt.s32.totalorder %s18, 2
      %s301 = scalar_select %p300, %s18, 2
      %s302 = smul.addr %s301, 4
      %s303 = scalar_lea.vmem %s1, %s302
      %p304 = scmp.lt.s32.totalorder %s18, 2
      %s305 = scalar_select %p304, %s18, 2
      %s306 = smul.addr %s305, 8
      %s307 = scalar_lea.vmem %s2, %s306
      %p308 = scmp.lt.s32.totalorder %s18, 2
      %s309 = scalar_select %p308, %s18, 2
      %s310 = smul.addr %s309, 8
      %s311 = scalar_lea.vmem %s3, %s310
      %p313 = scmp.eq.s32.totalorder %s18, 0
      // Predicated region
      $region49: #{tgnn_forward.5} parent=47 // pred_check
        %p314 = pneg %p313
      $region50: #{tgnn_forward.5} parent=47 // pred_check_branch
        %316 = sbr.rel (%p314) target = $region52
      $region51: #{tgnn_forward.5} parent=47 // pred_region
        %317 = vst [vmem:[#allocation2] sm:$0xff] 0.0
        %318 = vst [vmem:[#allocation2 + $0x8] sm:$0xff] 0.0
        %vm319 = vcmask 0
        %320 = vst.msk [vmem:[#allocation3] sm:$0x1] %vm319, 0.0
      $region52: #{tgnn_forward.5} parent=47 // pred_fallthru
        _
      %v321 = vld [vmem:[%s299] sm:$0xf]
      %v322 = vld [vmem:[%s303] sm:$0xf]
      %v323 = vld [vmem:[%s4] sm:$0xf]
      %v324 = vld [vmem:[%s4 + $0x4] sm:$0xf]
      %v327 = vunpack.c.l.b16 %v323
      %v328 = vunpack.c.l.b16 %v324
      %v329 = vpack.c.b16 %v328, %v327
      %vm331 = vcmask 130048
      %v333 = vsel %vm331, %v321, 0
      %335 = vmatprep.subr.bf16.mxu0 0
      %336 = vmatpush1.bf16.msra.mxu0 %v329
      %337 = vmatprep.subr.bf16.mxu0 0
      %338 = vmatpush1.bf16.msra.mxu0 0
      %339 = vmatprep.subr.bf16.mxu0 0
      %340 = vmatpush1.bf16.msra.mxu0 0
      %341 = vmatprep.subr.bf16.mxu0 0
      %342 = vmatpush1.bf16.msra.mxu0 0
      %343 = vmatprep.subr.bf16.mxu0 0
      %344 = vmatpush1.bf16.msra.mxu0 0
      %345 = vmatprep.subr.bf16.mxu0 0
      %346 = vmatpush1.bf16.msra.mxu0 0
      %347 = vmatprep.subr.bf16.mxu0 0
      %348 = vmatpush1.bf16.msra.mxu0 0
      %349 = vmatprep.subr.bf16.mxu0 0
      %350 = vmatpush1.bf16.msra.mxu0 0
      %351 = vmatprep.subr.bf16.mxu0 0
      %352 = vmatpush1.bf16.msra.mxu0 0
      %353 = vmatprep.subr.bf16.mxu0 0
      %354 = vmatpush1.bf16.msra.mxu0 0
      %355 = vmatprep.subr.bf16.mxu0 0
      %356 = vmatpush1.bf16.msra.mxu0 0
      %357 = vmatprep.subr.bf16.mxu0 0
      %358 = vmatpush1.bf16.msra.mxu0 0
      %359 = vmatprep.subr.bf16.mxu0 0
      %360 = vmatpush1.bf16.msra.mxu0 0
      %361 = vmatprep.subr.bf16.mxu0 0
      %362 = vmatpush1.bf16.msra.mxu0 0
      %363 = vmatprep.subr.bf16.mxu0 0
      %364 = vmatpush1.bf16.msra.mxu0 0
      %365 = vmatprep.subr.bf16.mxu0 0
      %366 = vmatpush1.bf16.msra.mxu0 0
      %367 = vmatprep.mubr.bf16.mxu0 0
      %368 = vmatmul.mubr.bf16.gmra.mrb[0].mxu0 %v333
      %v369 = vpop.f32.mrb[0].mxu0
      %v370 = vadd.f32 0.0, %v369
      %v371 = vpop.f32.mrb[0].mxu0
      %v372 = vpop.f32.mrb[0].mxu0
      %v373 = vpop.f32.mrb[0].mxu0
      %374 = vdwg.mxu0
      %v375 = vld [vmem:[%s5] sm:$0xff]
      %v376 = vld [vmem:[%s5 + $0x8] sm:$0xff]
      %v377 = vld [vmem:[%s5 + $0x10] sm:$0xff]
      %v378 = vld [vmem:[%s5 + $0x18] sm:$0xff]
      %v379 = vld [vmem:[%s5 + $0x20] sm:$0xff]
      %v380 = vld [vmem:[%s5 + $0x28] sm:$0xff]
      %v381 = vld [vmem:[%s5 + $0x30] sm:$0xff]
      %v382 = vld [vmem:[%s5 + $0x38] sm:$0xff]
      %v383 = vld [vmem:[%s5 + $0x40] sm:$0xff]
      %v384 = vld [vmem:[%s5 + $0x48] sm:$0xff]
      %v385 = vld [vmem:[%s5 + $0x50] sm:$0xff]
      %v386 = vld [vmem:[%s5 + $0x58] sm:$0xff]
      %v387 = vld [vmem:[%s5 + $0x60] sm:$0xff]
      %v388 = vld [vmem:[%s5 + $0x68] sm:$0xff]
      %v389 = vld [vmem:[%s5 + $0x70] sm:$0xff]
      %v390 = vld [vmem:[%s5 + $0x78] sm:$0xff]
      %v391 = vld [vmem:[%s6] sm:$0xff]
      %v392 = vld [vmem:[%s6 + $0x8] sm:$0xff]
      %v394 = vsel %vm331, %v322, 0
      %396 = vmatprep.subr.mxu0 0.0
      %397 = vmatpush1.msra.mxu0 %v391
      %398 = vmatprep.subr.mxu0 0.0
      %399 = vmatpush1.msra.mxu0 %v392
      %400 = vmatprep.subr.mxu0 0.0
      %401 = vmatpush1.msra.mxu0 0.0
      %402 = vmatprep.subr.mxu0 0.0
      %403 = vmatpush1.msra.mxu0 0.0
      %404 = vmatprep.subr.mxu0 0.0
      %405 = vmatpush1.msra.mxu0 0.0
      %406 = vmatprep.subr.mxu0 0.0
      %407 = vmatpush1.msra.mxu0 0.0
      %408 = vmatprep.subr.mxu0 0.0
      %409 = vmatpush1.msra.mxu0 0.0
      %410 = vmatprep.subr.mxu0 0.0
      %411 = vmatpush1.msra.mxu0 0.0
      %412 = vmatprep.subr.mxu0 0.0
      %413 = vmatpush1.msra.mxu0 0.0
      %414 = vmatprep.subr.mxu0 0.0
      %415 = vmatpush1.msra.mxu0 0.0
      %416 = vmatprep.subr.mxu0 0.0
      %417 = vmatpush1.msra.mxu0 0.0
      %418 = vmatprep.subr.mxu0 0.0
      %419 = vmatpush1.msra.mxu0 0.0
      %420 = vmatprep.subr.mxu0 0.0
      %421 = vmatpush1.msra.mxu0 0.0
      %422 = vmatprep.subr.mxu0 0.0
      %423 = vmatpush1.msra.mxu0 0.0
      %424 = vmatprep.subr.mxu0 0.0
      %425 = vmatpush1.msra.mxu0 0.0
      %426 = vmatprep.subr.mxu0 0.0
      %427 = vmatpush1.msra.mxu0 0.0
      %428 = vmatprep.subr.mxu0 0.0
      %429 = vmatpush1.msra.mxu0 0.0
      %430 = vmatprep.subr.mxu0 0.0
      %431 = vmatpush1.msra.mxu0 0.0
      %432 = vmatprep.subr.mxu0 0.0
      %433 = vmatpush1.msra.mxu0 0.0
      %434 = vmatprep.subr.mxu0 0.0
      %435 = vmatpush1.msra.mxu0 0.0
      %436 = vmatprep.subr.mxu0 0.0
      %437 = vmatpush1.msra.mxu0 0.0
      %438 = vmatprep.subr.mxu0 0.0
      %439 = vmatpush1.msra.mxu0 0.0
      %440 = vmatprep.subr.mxu0 0.0
      %441 = vmatpush1.msra.mxu0 0.0
      %442 = vmatprep.subr.mxu0 0.0
      %443 = vmatpush1.msra.mxu0 0.0
      %444 = vmatprep.subr.mxu0 0.0
      %445 = vmatpush1.msra.mxu0 0.0
      %446 = vmatprep.subr.mxu0 0.0
      %447 = vmatpush1.msra.mxu0 0.0
      %448 = vmatprep.subr.mxu0 0.0
      %449 = vmatpush1.msra.mxu0 0.0
      %450 = vmatprep.subr.mxu0 0.0
      %451 = vmatpush1.msra.mxu0 0.0
      %452 = vmatprep.subr.mxu0 0.0
      %453 = vmatpush1.msra.mxu0 0.0
      %454 = vmatprep.subr.mxu0 0.0
      %455 = vmatpush1.msra.mxu0 0.0
      %456 = vmatprep.subr.mxu0 0.0
      %457 = vmatpush1.msra.mxu0 0.0
      %458 = vmatprep.subr.mxu0 0.0
      %459 = vmatpush1.msra.mxu0 0.0
      %460 = vmatprep.mubr.bf16.mxu0 0
      %461 = vmatmul.mubr.bf16.gmra.mrb[0].mxu0 %v394
      %v462 = vpop.f32.mrb[0].mxu0
      %v463 = vadd.f32 0.0, %v462
      %v464 = vpop.f32.mrb[0].mxu0
      %v465 = vpop.f32.mrb[0].mxu0
      %v466 = vpop.f32.mrb[0].mxu0
      %467 = vdwg.mxu0
      %468 = vmatprep.subr.mxu0 0.0
      %469 = vmatpush1.msra.mxu0 %v375
      %470 = vmatprep.subr.mxu0 0.0
      %471 = vmatpush1.msra.mxu0 %v376
      %472 = vmatprep.subr.mxu0 0.0
      %473 = vmatpush1.msra.mxu0 %v377
      %474 = vmatprep.subr.mxu0 0.0
      %475 = vmatpush1.msra.mxu0 %v378
      %476 = vmatprep.subr.mxu0 0.0
      %477 = vmatpush1.msra.mxu0 %v379
      %478 = vmatprep.subr.mxu0 0.0
      %479 = vmatpush1.msra.mxu0 %v380
      %480 = vmatprep.subr.mxu0 0.0
      %481 = vmatpush1.msra.mxu0 %v381
      %482 = vmatprep.subr.mxu0 0.0
      %483 = vmatpush1.msra.mxu0 %v382
      %484 = vmatprep.subr.mxu0 0.0
      %485 = vmatpush1.msra.mxu0 %v383
      %486 = vmatprep.subr.mxu0 0.0
      %487 = vmatpush1.msra.mxu0 %v384
      %488 = vmatprep.subr.mxu0 0.0
      %489 = vmatpush1.msra.mxu0 %v385
      %490 = vmatprep.subr.mxu0 0.0
      %491 = vmatpush1.msra.mxu0 %v386
      %492 = vmatprep.subr.mxu0 0.0
      %493 = vmatpush1.msra.mxu0 %v387
      %494 = vmatprep.subr.mxu0 0.0
      %495 = vmatpush1.msra.mxu0 %v388
      %496 = vmatprep.subr.mxu0 0.0
      %497 = vmatpush1.msra.mxu0 %v389
      %498 = vmatprep.subr.mxu0 0.0
      %499 = vmatpush1.msra.mxu0 %v390
      %500 = vmatprep.subr.mxu0 0.0
      %501 = vmatpush1.msra.mxu0 0.0
      %502 = vmatprep.subr.mxu0 0.0
      %503 = vmatpush1.msra.mxu0 0.0
      %504 = vmatprep.subr.mxu0 0.0
      %505 = vmatpush1.msra.mxu0 0.0
      %506 = vmatprep.subr.mxu0 0.0
      %507 = vmatpush1.msra.mxu0 0.0
      %508 = vmatprep.subr.mxu0 0.0
      %509 = vmatpush1.msra.mxu0 0.0
      %510 = vmatprep.subr.mxu0 0.0
      %511 = vmatpush1.msra.mxu0 0.0
      %512 = vmatprep.subr.mxu0 0.0
      %513 = vmatpush1.msra.mxu0 0.0
      %514 = vmatprep.subr.mxu0 0.0
      %515 = vmatpush1.msra.mxu0 0.0
      %516 = vmatprep.subr.mxu0 0.0
      %517 = vmatpush1.msra.mxu0 0.0
      %518 = vmatprep.subr.mxu0 0.0
      %519 = vmatpush1.msra.mxu0 0.0
      %520 = vmatprep.subr.mxu0 0.0
      %521 = vmatpush1.msra.mxu0 0.0
      %522 = vmatprep.subr.mxu0 0.0
      %523 = vmatpush1.msra.mxu0 0.0
      %524 = vmatprep.subr.mxu0 0.0
      %525 = vmatpush1.msra.mxu0 0.0
      %526 = vmatprep.subr.mxu0 0.0
      %527 = vmatpush1.msra.mxu0 0.0
      %528 = vmatprep.subr.mxu0 0.0
      %529 = vmatpush1.msra.mxu0 0.0
      %530 = vmatprep.subr.mxu0 0.0
      %531 = vmatpush1.msra.mxu0 0.0
      %532 = vmatprep.mubr.f32.mxu0 0.0
      %533 = vmatmul.mubr.f32.gmra.mrb[0].mxu0 %v370
      %v534 = vpop.f32.mrb[0].mxu0
      %v535 = vadd.f32 %v463, %v534
      %v536 = vpop.f32.mrb[0].mxu0
      %537 = vdwg.mxu0
      %v538 = vld [vmem:[%s307] sm:$0xff]
      %v539 = vadd.f32 %v535, %v538
      %v540 = vmul.f32 %v539, 0.125
      %vm541 = vcmp.ge.f32.partialorder %v540, 0.0
      %v542 = vmul.f32 %v540, 0.2
      %v543 = vsel %vm541, %v540, %v542
      %v544 = vsub.f32 0.0, %v543
      %v545 = vmul.f32 %v544, 1.442695
      %v546 = vpow.pop %v545
      %v547 = vld [vmem:[%s311] sm:$0xff]
      %v548 = vmul.f32 %v546, %v547
      %v549 = vld [vmem:[#allocation3] sm:$0x1]
      %vm550 = vcmask 7168
      %v551 = vsel %vm550, %v548, 0.0
      %552 = vadd.xlane.f32.xlu0 %v551
      %v553 = vpop.xlane.xlu0 %552
      %v554 = vrot.slane %v553, 4
      %v555 = vadd.f32 %v553, %v554
      %v556 = vrot.slane %v555, 2
      %v557 = vadd.f32 %v555, %v556
      %v558 = vrot.slane %v557, 1
      %v559 = vadd.f32 %v557, %v558
      %s560 = vtos %v559
      %v561 = vstv %s560
      %v562 = vadd.f32 %v549, %v561
      %vm563 = vcmask 0
      %564 = vst.msk [vmem:[#allocation3] sm:$0x1] %vm563, %v562
      %566 = vset.pattern.permute.xlu0 0
      %567 = vperm.xlu0 %566, %v548
      %v568 = vpop.permute.xlu0 %567
      %v570 = vmul.f32 %v370, %v568
      %v571 = vpack.c.bf16 %v570, %v570
      %v572 = vld [vmem:[#allocation2] sm:$0xff]
      %v573 = vld [vmem:[#allocation2 + $0x8] sm:$0xff]
      %574 = vxpose.xlu0.c.b16.start [1/8] %v322, 128
      %575 = vxpose.xlu0.c.b16.cont [2/8] 0, 128
      %576 = vxpose.xlu0.c.b16.cont [3/8] 0, 128
      %577 = vxpose.xlu0.c.b16.cont [4/8] 0, 128
      %578 = vxpose.xlu0.c.b16.cont [5/8] 0, 128
      %579 = vxpose.xlu0.c.b16.cont [6/8] 0, 128
      %580 = vxpose.xlu0.c.b16.cont [7/8] 0, 128
      %581 = vxpose.xlu0.c.b16.end [8/8] 0, 128
      %v582 = vpop.trf.xlu0
      %v583 = vpop.trf.xlu0
      %v584 = vpop.trf.xlu0
      %v585 = vpop.trf.xlu0
      %v586 = vpop.trf.xlu0
      %v587 = vpop.trf.xlu0
      %v588 = vpop.trf.xlu0
      %v589 = vpop.trf.xlu0
      %vm590 = vcmask 64512
      %v592 = vsel %vm590, %v582, 0
      %vm594 = vcmask 1043456
      %v596 = vsel %vm594, %v571, 0
      %598 = vmatprep.subr.bf16.mxu0 0
      %599 = vmatpush1.bf16.msra.mxu0 %v596
      %600 = vmatprep.subr.bf16.mxu0 0
      %601 = vmatpush1.bf16.msra.mxu0 0
      %602 = vmatprep.subr.bf16.mxu0 0
      %603 = vmatpush1.bf16.msra.mxu0 0
      %604 = vmatprep.subr.bf16.mxu0 0
      %605 = vmatpush1.bf16.msra.mxu0 0
      %606 = vmatprep.subr.bf16.mxu0 0
      %607 = vmatpush1.bf16.msra.mxu0 0
      %608 = vmatprep.subr.bf16.mxu0 0
      %609 = vmatpush1.bf16.msra.mxu0 0
      %610 = vmatprep.subr.bf16.mxu0 0
      %611 = vmatpush1.bf16.msra.mxu0 0
      %612 = vmatprep.subr.bf16.mxu0 0
      %613 = vmatpush1.bf16.msra.mxu0 0
      %614 = vmatprep.subr.bf16.mxu0 0
      %615 = vmatpush1.bf16.msra.mxu0 0
      %616 = vmatprep.subr.bf16.mxu0 0
      %617 = vmatpush1.bf16.msra.mxu0 0
      %618 = vmatprep.subr.bf16.mxu0 0
      %619 = vmatpush1.bf16.msra.mxu0 0
      %620 = vmatprep.subr.bf16.mxu0 0
      %621 = vmatpush1.bf16.msra.mxu0 0
      %622 = vmatprep.subr.bf16.mxu0 0
      %623 = vmatpush1.bf16.msra.mxu0 0
      %624 = vmatprep.subr.bf16.mxu0 0
      %625 = vmatpush1.bf16.msra.mxu0 0
      %626 = vmatprep.subr.bf16.mxu0 0
      %627 = vmatpush1.bf16.msra.mxu0 0
      %628 = vmatprep.subr.bf16.mxu0 0
      %629 = vmatpush1.bf16.msra.mxu0 0
      %630 = vmatprep.mubr.bf16.mxu0 0
      %631 = vmatmul.mubr.bf16.gmra.mrb[0].mxu0 %v592
      %v632 = vpop.f32.mrb[0].mxu0
      %v633 = vadd.f32 0.0, %v632
      %v634 = vpop.f32.mrb[0].mxu0
      %v635 = vpop.f32.mrb[0].mxu0
      %v636 = vadd.f32 0.0, %v635
      %v637 = vpop.f32.mrb[0].mxu0
      %638 = vdwg.mxu0
      %v639 = vadd.f32 %v572, %v633
      %v640 = vadd.f32 %v573, %v636
      %641 = vst [vmem:[#allocation2] sm:$0xff] %v639
      %642 = vst [vmem:[#allocation2 + $0x8] sm:$0xff] %v640
      %p643 = scmp.eq.s32.totalorder %s18, 2
      // Predicated region
      $region53: #{tgnn_forward.5} parent=47 // pred_check
        %p644 = pneg %p643
      $region54: #{tgnn_forward.5} parent=47 // pred_check_branch
        %646 = sbr.rel (%p644) target = $region56
      $region55: #{tgnn_forward.5} parent=47 // pred_region
        %v647 = vld [vmem:[#allocation3] sm:$0x1]
        %v648 = vrcp.pop %v647
        %v649 = vld [vmem:[#allocation2] sm:$0xff]
        %v650 = vld [vmem:[#allocation2 + $0x8] sm:$0xff]
        %v652 = vlaneseq
        %v653 = vshrl.u32 %v652, 7
        %v654 = vsub.s32 0, %v653
        %v655 = vrot.slane %v648, %v654
        %656 = vset.pattern.permute.xlu0 0
        %657 = vperm.xlu0 %656, %v655
        %v658 = vpop.permute.xlu0 %657
        %v660 = vmul.f32 %v649, %v658
        %v661 = vmul.f32 %v650, %v658
        %vm662 = vcmp.ge.f32.partialorder %v660, 0.0
        %vm663 = vcmp.ge.f32.partialorder %v661, 0.0
        %v664 = vmul.f32 %v660, 0.2
        %v665 = vmul.f32 %v661, 0.2
        %v666 = vsel %vm662, %v660, %v664
        %v667 = vsel %vm663, %v661, %v665
        %668 = vst [vmem:[%s7] sm:$0xff] %v666
        %669 = vst [vmem:[%s7 + $0x8] sm:$0xff] %v667
      $region56: #{tgnn_forward.5} parent=47 // pred_fallthru
        _
      // Predicated region
      $region57: #{tgnn_forward.5} parent=47 // pred_check
        %p670 = pneg %p198
      $region58: #{tgnn_forward.5} parent=47 // pred_check_branch
        %672 = sbr.rel (%p670) target = $region60
      $region59: #{tgnn_forward.5} parent=47 // pred_region
        _
      $region60: #{tgnn_forward.5} parent=47 // pred_fallthru
        _
      // Predicated region
      $region61: #{tgnn_forward.5} parent=47 // pred_check
        %p673 = pneg %p198
      $region62: #{tgnn_forward.5} parent=47 // pred_check_branch
        %675 = sbr.rel (%p673) target = $region64
      $region63: #{tgnn_forward.5} parent=47 // pred_region
        _
      $region64: #{tgnn_forward.5} parent=47 // pred_fallthru
        _
    $region48: #{tgnn_forward.5} parent=5 // pred_fallthru
      _
    %p676 = scmp.le.s32.totalorder 2, %s13
    // Predicated region
    $region65: #{tgnn_forward.5} parent=5 // pred_check
      %p677 = pneg %p676
    $region66: #{tgnn_forward.5} parent=5 // pred_check_branch
      %679 = sbr.rel (%p677) target = $region68
    $region67: #{tgnn_forward.5} parent=5 // pred_region
      %s680 = ssub.s32 %s13, 2
    $region68: #{tgnn_forward.5} parent=5 // pred_fallthru
      _
  $region6: #{tgnn_forward.5} parent=0 // loop_footer
    %s17 = sadd.s32 1, %s13
  $region7: #{tgnn_forward.5} parent=0 // loop_footer_branch
    %12 = sbr.rel target = $region3
  $region8: #{tgnn_forward.5} parent=0 // loop_exit
    _

// kernel: tgnn_forward.7
$region0: #{tgnn_forward.7}
  #allocation0 [shape = 'u32[]', space=smem, size = 0x4, offset = 0x4, fixed_abs, tag = 'smem constant byte address 0x4 - core index']
  #allocation1 [shape = 'u32[144,128]{1,0:T(1,128)}', space=vmem, size = 0x12000, scoped, tag = 'internal scratch']
  #allocation2 [shape = 'f32[16,128]{1,0:T(8,128)}', space=vmem, size = 0x2000, scoped, tag = 'scratch operand']
  #allocation3 [shape = 'f32[1,1]{1,0:T(1,128)}', space=vmem, size = 0x200, scoped, tag = 'scratch operand']
  %s0 = inlined_call_operand.vmem [shape: bf16[24,16], index: 0, kind: input, shape index: {}]
  %s1 = inlined_call_operand.vmem [shape: bf16[24,16], index: 1, kind: input, shape index: {}]
  %s2 = inlined_call_operand.vmem [shape: f32[24,1], index: 2, kind: input, shape index: {}]
  %s3 = inlined_call_operand.vmem [shape: f32[24,1], index: 3, kind: input, shape index: {}]
  %s4 = inlined_call_operand.vmem [shape: bf16[16,128], index: 4, kind: input, shape index: {}]
  %s5 = inlined_call_operand.vmem [shape: f32[128,1], index: 5, kind: input, shape index: {}]
  %s6 = inlined_call_operand.vmem [shape: f32[16,1], index: 6, kind: input, shape index: {}]
  %s7 = inlined_call_operand.hbm [shape: f32[16,128], index: 7, kind: output, shape index: {}]
  %s8 = sld [smem:[#allocation0]]
  $region69: #{tgnn_forward.7} parent=0
    _
  %s10 = ssub.s32 1, %s8
  %s11 = scalar_select 0, %s10, %s8
  $region1: #{tgnn_forward.7} parent=0
    #allocation4 [shape = 'u8[8192]{0}', space=vmem, size = 0x2000, scoped, tag = 'output window, operand 0, single buffered']
    #allocation5 [shape = 's32[2]{0}', space=sflag, size = 0x8, scoped, tag = 'scoped memory for tgnn_forward.7']
    %12 = vsyncpa [#allocation5], 0
    loop: start=0, step=1, limit=5
    $region2: #{tgnn_forward.7} parent=1 // loop_pre_header
      _
    $region3: #{tgnn_forward.7} parent=1 // loop_header
      %s14 = sphi 0, %s18
      %p15 = scmp.ge.s32.totalorder %s14, 5
      %s24 = sphi 0, %s26
      %s27 = sphi 0, %s24
      %s28 = sphi 0, %s27
      %s44 = sphi 0, %s28
      %s50 = sphi 0, %s52
      %s53 = sphi 0, %s50
      %s54 = sphi 0, %s53
      %s70 = sphi 0, %s54
      %s76 = sphi 0, %s78
      %s79 = sphi 0, %s76
      %s80 = sphi 0, %s79
      %s96 = sphi 0, %s80
      %s102 = sphi 0, %s104
      %s105 = sphi 0, %s102
      %s106 = sphi 0, %s105
      %s122 = sphi 0, %s106
      %s126 = sphi 0, %s126
      %s128 = sphi 0, %s126
      %s129 = sphi 0, %s128
      %s143 = sphi 0, %s129
      %s147 = sphi 0, %s147
      %s149 = sphi 0, %s147
      %s150 = sphi 0, %s149
      %s164 = sphi 0, %s150
      %s168 = sphi 0, %s168
      %s170 = sphi 0, %s168
      %s171 = sphi 0, %s170
      %s185 = sphi 0, %s171
      %s189 = sphi 0, %s189
      %s191 = sphi 0, %s189
      %s192 = sphi 0, %s191
      %s206 = sphi 0, %s192
    $region4: #{tgnn_forward.7} parent=1 // loop_header_branch
      %17 = sbr.rel (%p15) target = $region8
    $region5: #{tgnn_forward.7} parent=1 // loop_body
      %s19 = ssub.s32 %s14, 1
      %s20 = ssub.s32 %s14, 2
      %s21 = sadd.s32 %s14, 1
      %s22 = ssub.s32 %s14, %s21
      %p23 = scmp.eq.s32.totalorder %s22, 0
      %s25 = sadd.s32 %s24, 1
      %s26 = scalar_select %p23, %s24, %s25
      %p29 = pneg %p23
      %p30 = scmp.eq.s32.totalorder %s14, 2
      %p31 = por %p29, %p30
      %p32 = scmp.ne.s32.totalorder %s24, %s27
      %p33 = scmp.eq.s32.totalorder %s14, 0
      %p34 = por %p32, %p33
      %p35 = scmp.ne.s32.totalorder %s24, %s27
      %p36 = scmp.eq.s32.totalorder %s19, 2
      %p37 = por %p35, %p36
      %p38 = scmp.ne.s32.totalorder %s27, %s28
      %p39 = scmp.eq.s32.totalorder %s19, 0
      %p40 = por %p38, %p39
      %p41 = scmp.ne.s32.totalorder %s27, %s28
      %p42 = scmp.eq.s32.totalorder %s20, 2
      %p43 = por %p41, %p42
      %p45 = scmp.ne.s32.totalorder %s28, %s44
      %p46 = scmp.eq.s32.totalorder %s20, 0
      %p47 = por %p45, %p46
      %s48 = ssub.s32 %s14, %s21
      %p49 = scmp.eq.s32.totalorder %s48, 0
      %s51 = sadd.s32 %s50, 1
      %s52 = scalar_select %p49, %s50, %s51
      %p55 = pneg %p49
      %p56 = scmp.eq.s32.totalorder %s14, 2
      %p57 = por %p55, %p56
      %p58 = scmp.ne.s32.totalorder %s50, %s53
      %p59 = scmp.eq.s32.totalorder %s14, 0
      %p60 = por %p58, %p59
      %p61 = scmp.ne.s32.totalorder %s50, %s53
      %p62 = scmp.eq.s32.totalorder %s19, 2
      %p63 = por %p61, %p62
      %p64 = scmp.ne.s32.totalorder %s53, %s54
      %p65 = scmp.eq.s32.totalorder %s19, 0
      %p66 = por %p64, %p65
      %p67 = scmp.ne.s32.totalorder %s53, %s54
      %p68 = scmp.eq.s32.totalorder %s20, 2
      %p69 = por %p67, %p68
      %p71 = scmp.ne.s32.totalorder %s54, %s70
      %p72 = scmp.eq.s32.totalorder %s20, 0
      %p73 = por %p71, %p72
      %s74 = ssub.s32 %s14, %s21
      %p75 = scmp.eq.s32.totalorder %s74, 0
      %s77 = sadd.s32 %s76, 1
      %s78 = scalar_select %p75, %s76, %s77
      %p81 = pneg %p75
      %p82 = scmp.eq.s32.totalorder %s14, 2
      %p83 = por %p81, %p82
      %p84 = scmp.ne.s32.totalorder %s76, %s79
      %p85 = scmp.eq.s32.totalorder %s14, 0
      %p86 = por %p84, %p85
      %p87 = scmp.ne.s32.totalorder %s76, %s79
      %p88 = scmp.eq.s32.totalorder %s19, 2
      %p89 = por %p87, %p88
      %p90 = scmp.ne.s32.totalorder %s79, %s80
      %p91 = scmp.eq.s32.totalorder %s19, 0
      %p92 = por %p90, %p91
      %p93 = scmp.ne.s32.totalorder %s79, %s80
      %p94 = scmp.eq.s32.totalorder %s20, 2
      %p95 = por %p93, %p94
      %p97 = scmp.ne.s32.totalorder %s80, %s96
      %p98 = scmp.eq.s32.totalorder %s20, 0
      %p99 = por %p97, %p98
      %s100 = ssub.s32 %s14, %s21
      %p101 = scmp.eq.s32.totalorder %s100, 0
      %s103 = sadd.s32 %s102, 1
      %s104 = scalar_select %p101, %s102, %s103
      %p107 = pneg %p101
      %p108 = scmp.eq.s32.totalorder %s14, 2
      %p109 = por %p107, %p108
      %p110 = scmp.ne.s32.totalorder %s102, %s105
      %p111 = scmp.eq.s32.totalorder %s14, 0
      %p112 = por %p110, %p111
      %p113 = scmp.ne.s32.totalorder %s102, %s105
      %p114 = scmp.eq.s32.totalorder %s19, 2
      %p115 = por %p113, %p114
      %p116 = scmp.ne.s32.totalorder %s105, %s106
      %p117 = scmp.eq.s32.totalorder %s19, 0
      %p118 = por %p116, %p117
      %p119 = scmp.ne.s32.totalorder %s105, %s106
      %p120 = scmp.eq.s32.totalorder %s20, 2
      %p121 = por %p119, %p120
      %p123 = scmp.ne.s32.totalorder %s106, %s122
      %p124 = scmp.eq.s32.totalorder %s20, 0
      %p125 = por %p123, %p124
      %s127 = sadd.s32 %s126, 1
      %p130 = scmp.eq.s32.totalorder %s14, 2
      %p131 = scmp.ne.s32.totalorder %s126, %s128
      %p132 = scmp.eq.s32.totalorder %s14, 0
      %p133 = por %p131, %p132
      %p134 = scmp.ne.s32.totalorder %s126, %s128
      %p135 = scmp.eq.s32.totalorder %s19, 2
      %p136 = por %p134, %p135
      %p137 = scmp.ne.s32.totalorder %s128, %s129
      %p138 = scmp.eq.s32.totalorder %s19, 0
      %p139 = por %p137, %p138
      %p140 = scmp.ne.s32.totalorder %s128, %s129
      %p141 = scmp.eq.s32.totalorder %s20, 2
      %p142 = por %p140, %p141
      %p144 = scmp.ne.s32.totalorder %s129, %s143
      %p145 = scmp.eq.s32.totalorder %s20, 0
      %p146 = por %p144, %p145
      %s148 = sadd.s32 %s147, 1
      %p151 = scmp.eq.s32.totalorder %s14, 2
      %p152 = scmp.ne.s32.totalorder %s147, %s149
      %p153 = scmp.eq.s32.totalorder %s14, 0
      %p154 = por %p152, %p153
      %p155 = scmp.ne.s32.totalorder %s147, %s149
      %p156 = scmp.eq.s32.totalorder %s19, 2
      %p157 = por %p155, %p156
      %p158 = scmp.ne.s32.totalorder %s149, %s150
      %p159 = scmp.eq.s32.totalorder %s19, 0
      %p160 = por %p158, %p159
      %p161 = scmp.ne.s32.totalorder %s149, %s150
      %p162 = scmp.eq.s32.totalorder %s20, 2
      %p163 = por %p161, %p162
      %p165 = scmp.ne.s32.totalorder %s150, %s164
      %p166 = scmp.eq.s32.totalorder %s20, 0
      %p167 = por %p165, %p166
      %s169 = sadd.s32 %s168, 1
      %p172 = scmp.eq.s32.totalorder %s14, 2
      %p173 = scmp.ne.s32.totalorder %s168, %s170
      %p174 = scmp.eq.s32.totalorder %s14, 0
      %p175 = por %p173, %p174
      %p176 = scmp.ne.s32.totalorder %s168, %s170
      %p177 = scmp.eq.s32.totalorder %s19, 2
      %p178 = por %p176, %p177
      %p179 = scmp.ne.s32.totalorder %s170, %s171
      %p180 = scmp.eq.s32.totalorder %s19, 0
      %p181 = por %p179, %p180
      %p182 = scmp.ne.s32.totalorder %s170, %s171
      %p183 = scmp.eq.s32.totalorder %s20, 2
      %p184 = por %p182, %p183
      %p186 = scmp.ne.s32.totalorder %s171, %s185
      %p187 = scmp.eq.s32.totalorder %s20, 0
      %p188 = por %p186, %p187
      %s190 = sadd.s32 %s189, 1
      %p193 = scmp.eq.s32.totalorder %s14, 2
      %p194 = scmp.ne.s32.totalorder %s189, %s191
      %p195 = scmp.eq.s32.totalorder %s14, 0
      %p196 = por %p194, %p195
      %p197 = scmp.ne.s32.totalorder %s189, %s191
      %p198 = scmp.eq.s32.totalorder %s19, 2
      %p199 = por %p197, %p198
      %p200 = scmp.ne.s32.totalorder %s191, %s192
      %p201 = scmp.eq.s32.totalorder %s19, 0
      %p202 = por %p200, %p201
      %p203 = scmp.ne.s32.totalorder %s191, %s192
      %p204 = scmp.eq.s32.totalorder %s20, 2
      %p205 = por %p203, %p204
      %p207 = scmp.ne.s32.totalorder %s192, %s206
      %p208 = scmp.eq.s32.totalorder %s20, 0
      %p209 = por %p207, %p208
      %p210 = scmp.le.s32.totalorder 1, %s14
      %p211 = scmp.lt.s32.totalorder %s14, 4
      %p212 = pnand %p210, %p211
      %p213 = pneg %p212
      // Predicated region
      $region9: #{tgnn_forward.7} parent=5 // pred_check
        _
      $region10: #{tgnn_forward.7} parent=5 // pred_check_branch
        %215 = sbr.rel (%p212) target = $region12
      $region11: #{tgnn_forward.7} parent=5 // pred_region
        %s216 = ssub.s32 %s14, 1
        // Predicated region
        $region13: #{tgnn_forward.7} parent=11 // pred_check
          %p217 = pneg %p139
        $region14: #{tgnn_forward.7} parent=11 // pred_check_branch
          %219 = sbr.rel (%p217) target = $region16
        $region15: #{tgnn_forward.7} parent=11 // pred_region
          _
        $region16: #{tgnn_forward.7} parent=11 // pred_fallthru
          _
        // Predicated region
        $region17: #{tgnn_forward.7} parent=11 // pred_check
          %p220 = pneg %p160
        $region18: #{tgnn_forward.7} parent=11 // pred_check_branch
          %222 = sbr.rel (%p220) target = $region20
        $region19: #{tgnn_forward.7} parent=11 // pred_region
          _
        $region20: #{tgnn_forward.7} parent=11 // pred_fallthru
          _
        // Predicated region
        $region21: #{tgnn_forward.7} parent=11 // pred_check
          %p223 = pneg %p181
        $region22: #{tgnn_forward.7} parent=11 // pred_check_branch
          %225 = sbr.rel (%p223) target = $region24
        $region23: #{tgnn_forward.7} parent=11 // pred_region
          _
        $region24: #{tgnn_forward.7} parent=11 // pred_fallthru
          _
      $region12: #{tgnn_forward.7} parent=5 // pred_fallthru
        _
      %p226 = scmp.lt.s32.totalorder %s14, 3
      // Predicated region
      $region25: #{tgnn_forward.7} parent=5 // pred_check
        %p227 = pneg %p226
      $region26: #{tgnn_forward.7} parent=5 // pred_check_branch
        %229 = sbr.rel (%p227) target = $region28
      $region27: #{tgnn_forward.7} parent=5 // pred_region
        // Predicated region
        $region29: #{tgnn_forward.7} parent=27 // pred_check
          %p230 = pneg %p34
        $region30: #{tgnn_forward.7} parent=27 // pred_check_branch
          %232 = sbr.rel (%p230) target = $region32
        $region31: #{tgnn_forward.7} parent=27 // pred_region
          %p233 = scmp.lt.s32.totalorder %s14, 2
          %s234 = scalar_select %p233, %s14, 2
          %s235 = smul.addr %s234, 4
          %s236 = scalar_lea.vmem %s0, %s235
        $region32: #{tgnn_forward.7} parent=27 // pred_fallthru
          _
        // Predicated region
        $region33: #{tgnn_forward.7} parent=27 // pred_check
          %p237 = pneg %p60
        $region34: #{tgnn_forward.7} parent=27 // pred_check_branch
          %239 = sbr.rel (%p237) target = $region36
        $region35: #{tgnn_forward.7} parent=27 // pred_region
          %p240 = scmp.lt.s32.totalorder %s14, 2
          %s241 = scalar_select %p240, %s14, 2
          %s242 = smul.addr %s241, 4
          %s243 = scalar_lea.vmem %s1, %s242
        $region36: #{tgnn_forward.7} parent=27 // pred_fallthru
          _
        // Predicated region
        $region37: #{tgnn_forward.7} parent=27 // pred_check
          %p244 = pneg %p86
        $region38: #{tgnn_forward.7} parent=27 // pred_check_branch
          %246 = sbr.rel (%p244) target = $region40
        $region39: #{tgnn_forward.7} parent=27 // pred_region
          %p247 = scmp.lt.s32.totalorder %s14, 2
          %s248 = scalar_select %p247, %s14, 2
          %s249 = smul.addr %s248, 8
          %s250 = scalar_lea.vmem %s2, %s249
        $region40: #{tgnn_forward.7} parent=27 // pred_fallthru
          _
        // Predicated region
        $region41: #{tgnn_forward.7} parent=27 // pred_check
          %p251 = pneg %p112
        $region42: #{tgnn_forward.7} parent=27 // pred_check_branch
          %253 = sbr.rel (%p251) target = $region44
        $region43: #{tgnn_forward.7} parent=27 // pred_region
          %p254 = scmp.lt.s32.totalorder %s14, 2
          %s255 = scalar_select %p254, %s14, 2
          %s256 = smul.addr %s255, 8
          %s257 = scalar_lea.vmem %s3, %s256
        $region44: #{tgnn_forward.7} parent=27 // pred_fallthru
          _
      $region28: #{tgnn_forward.7} parent=5 // pred_fallthru
        _
      %p258 = scmp.le.s32.totalorder 1, %s14
      %p259 = scmp.lt.s32.totalorder %s14, 4
      %p260 = pnand %p258, %p259
      %p261 = pneg %p260
      // Predicated region
      $region45: #{tgnn_forward.7} parent=5 // pred_check
        _
      $region46: #{tgnn_forward.7} parent=5 // pred_check_branch
        %263 = sbr.rel (%p260) target = $region48
      $region47: #{tgnn_forward.7} parent=5 // pred_region
        %s264 = ssub.s32 %s14, 1
        %p265 = scmp.lt.s32.totalorder %s19, 2
        %s266 = scalar_select %p265, %s19, 2
        %s267 = smul.addr %s266, 4
        %s268 = scalar_lea.vmem %s0, %s267
        %p269 = pneg %p40
        %p270 = pneg %p37
        %p271 = scmp.lt.s32.totalorder %s19, 2
        %s272 = scalar_select %p271, %s19, 2
        %s273 = smul.addr %s272, 4
        %s274 = scalar_lea.vmem %s1, %s273
        %p275 = pneg %p66
        %p276 = pneg %p63
        %p277 = scmp.lt.s32.totalorder %s19, 2
        %s278 = scalar_select %p277, %s19, 2
        %s279 = smul.addr %s278, 8
        %s280 = scalar_lea.vmem %s2, %s279
        %p281 = pneg %p92
        %p282 = pneg %p89
        %p283 = scmp.lt.s32.totalorder %s19, 2
        %s284 = scalar_select %p283, %s19, 2
        %s285 = smul.addr %s284, 8
        %s286 = scalar_lea.vmem %s3, %s285
        %p287 = pneg %p118
        %p288 = pneg %p115
        %p289 = pneg %p139
        %p290 = pneg %p136
        %p291 = pneg %p160
        %p292 = pneg %p157
        %p293 = pneg %p181
        %p294 = pneg %p178
        %p295 = pneg %p202
        %p296 = pneg %p199
        %p297 = scmp.lt.s32.totalorder %s19, 2
        %s298 = scalar_select %p297, %s19, 2
        %s299 = smul.addr %s298, 4
        %s300 = scalar_lea.vmem %s0, %s299
        %p301 = scmp.lt.s32.totalorder %s19, 2
        %s302 = scalar_select %p301, %s19, 2
        %s303 = smul.addr %s302, 4
        %s304 = scalar_lea.vmem %s1, %s303
        %p305 = scmp.lt.s32.totalorder %s19, 2
        %s306 = scalar_select %p305, %s19, 2
        %s307 = smul.addr %s306, 8
        %s308 = scalar_lea.vmem %s2, %s307
        %p309 = scmp.lt.s32.totalorder %s19, 2
        %s310 = scalar_select %p309, %s19, 2
        %s311 = smul.addr %s310, 8
        %s312 = scalar_lea.vmem %s3, %s311
        %p314 = scmp.eq.s32.totalorder %s19, 0
        // Predicated region
        $region49: #{tgnn_forward.7} parent=47 // pred_check
          %p315 = pneg %p314
        $region50: #{tgnn_forward.7} parent=47 // pred_check_branch
          %317 = sbr.rel (%p315) target = $region52
        $region51: #{tgnn_forward.7} parent=47 // pred_region
          %318 = vst [vmem:[#allocation2] sm:$0xff] 0.0
          %319 = vst [vmem:[#allocation2 + $0x8] sm:$0xff] 0.0
          %vm320 = vcmask 0
          %321 = vst.msk [vmem:[#allocation3] sm:$0x1] %vm320, 0.0
        $region52: #{tgnn_forward.7} parent=47 // pred_fallthru
          _
        %v322 = vld [vmem:[%s300] sm:$0xf]
        %v323 = vld [vmem:[%s304] sm:$0xf]
        %v324 = vld [vmem:[%s4] sm:$0xf]
        %v325 = vld [vmem:[%s4 + $0x4] sm:$0xf]
        %v328 = vunpack.c.l.b16 %v324
        %v329 = vunpack.c.l.b16 %v325
        %v330 = vpack.c.b16 %v329, %v328
        %vm332 = vcmask 130048
        %v334 = vsel %vm332, %v322, 0
        %336 = vmatprep.subr.bf16.mxu0 0
        %337 = vmatpush1.bf16.msra.mxu0 %v330
        %338 = vmatprep.subr.bf16.mxu0 0
        %339 = vmatpush1.bf16.msra.mxu0 0
        %340 = vmatprep.subr.bf16.mxu0 0
        %341 = vmatpush1.bf16.msra.mxu0 0
        %342 = vmatprep.subr.bf16.mxu0 0
        %343 = vmatpush1.bf16.msra.mxu0 0
        %344 = vmatprep.subr.bf16.mxu0 0
        %345 = vmatpush1.bf16.msra.mxu0 0
        %346 = vmatprep.subr.bf16.mxu0 0
        %347 = vmatpush1.bf16.msra.mxu0 0
        %348 = vmatprep.subr.bf16.mxu0 0
        %349 = vmatpush1.bf16.msra.mxu0 0
        %350 = vmatprep.subr.bf16.mxu0 0
        %351 = vmatpush1.bf16.msra.mxu0 0
        %352 = vmatprep.subr.bf16.mxu0 0
        %353 = vmatpush1.bf16.msra.mxu0 0
        %354 = vmatprep.subr.bf16.mxu0 0
        %355 = vmatpush1.bf16.msra.mxu0 0
        %356 = vmatprep.subr.bf16.mxu0 0
        %357 = vmatpush1.bf16.msra.mxu0 0
        %358 = vmatprep.subr.bf16.mxu0 0
        %359 = vmatpush1.bf16.msra.mxu0 0
        %360 = vmatprep.subr.bf16.mxu0 0
        %361 = vmatpush1.bf16.msra.mxu0 0
        %362 = vmatprep.subr.bf16.mxu0 0
        %363 = vmatpush1.bf16.msra.mxu0 0
        %364 = vmatprep.subr.bf16.mxu0 0
        %365 = vmatpush1.bf16.msra.mxu0 0
        %366 = vmatprep.subr.bf16.mxu0 0
        %367 = vmatpush1.bf16.msra.mxu0 0
        %368 = vmatprep.mubr.bf16.mxu0 0
        %369 = vmatmul.mubr.bf16.gmra.mrb[0].mxu0 %v334
        %v370 = vpop.f32.mrb[0].mxu0
        %v371 = vadd.f32 0.0, %v370
        %v372 = vpop.f32.mrb[0].mxu0
        %v373 = vpop.f32.mrb[0].mxu0
        %v374 = vpop.f32.mrb[0].mxu0
        %375 = vdwg.mxu0
        %v376 = vld [vmem:[%s5] sm:$0xff]
        %v377 = vld [vmem:[%s5 + $0x8] sm:$0xff]
        %v378 = vld [vmem:[%s5 + $0x10] sm:$0xff]
        %v379 = vld [vmem:[%s5 + $0x18] sm:$0xff]
        %v380 = vld [vmem:[%s5 + $0x20] sm:$0xff]
        %v381 = vld [vmem:[%s5 + $0x28] sm:$0xff]
        %v382 = vld [vmem:[%s5 + $0x30] sm:$0xff]
        %v383 = vld [vmem:[%s5 + $0x38] sm:$0xff]
        %v384 = vld [vmem:[%s5 + $0x40] sm:$0xff]
        %v385 = vld [vmem:[%s5 + $0x48] sm:$0xff]
        %v386 = vld [vmem:[%s5 + $0x50] sm:$0xff]
        %v387 = vld [vmem:[%s5 + $0x58] sm:$0xff]
        %v388 = vld [vmem:[%s5 + $0x60] sm:$0xff]
        %v389 = vld [vmem:[%s5 + $0x68] sm:$0xff]
        %v390 = vld [vmem:[%s5 + $0x70] sm:$0xff]
        %v391 = vld [vmem:[%s5 + $0x78] sm:$0xff]
        %v392 = vld [vmem:[%s6] sm:$0xff]
        %v393 = vld [vmem:[%s6 + $0x8] sm:$0xff]
        %v395 = vsel %vm332, %v323, 0
        %397 = vmatprep.subr.mxu0 0.0
        %398 = vmatpush1.msra.mxu0 %v392
        %399 = vmatprep.subr.mxu0 0.0
        %400 = vmatpush1.msra.mxu0 %v393
        %401 = vmatprep.subr.mxu0 0.0
        %402 = vmatpush1.msra.mxu0 0.0
        %403 = vmatprep.subr.mxu0 0.0
        %404 = vmatpush1.msra.mxu0 0.0
        %405 = vmatprep.subr.mxu0 0.0
        %406 = vmatpush1.msra.mxu0 0.0
        %407 = vmatprep.subr.mxu0 0.0
        %408 = vmatpush1.msra.mxu0 0.0
        %409 = vmatprep.subr.mxu0 0.0
        %410 = vmatpush1.msra.mxu0 0.0
        %411 = vmatprep.subr.mxu0 0.0
        %412 = vmatpush1.msra.mxu0 0.0
        %413 = vmatprep.subr.mxu0 0.0
        %414 = vmatpush1.msra.mxu0 0.0
        %415 = vmatprep.subr.mxu0 0.0
        %416 = vmatpush1.msra.mxu0 0.0
        %417 = vmatprep.subr.mxu0 0.0
        %418 = vmatpush1.msra.mxu0 0.0
        %419 = vmatprep.subr.mxu0 0.0
        %420 = vmatpush1.msra.mxu0 0.0
        %421 = vmatprep.subr.mxu0 0.0
        %422 = vmatpush1.msra.mxu0 0.0
        %423 = vmatprep.subr.mxu0 0.0
        %424 = vmatpush1.msra.mxu0 0.0
        %425 = vmatprep.subr.mxu0 0.0
        %426 = vmatpush1.msra.mxu0 0.0
        %427 = vmatprep.subr.mxu0 0.0
        %428 = vmatpush1.msra.mxu0 0.0
        %429 = vmatprep.subr.mxu0 0.0
        %430 = vmatpush1.msra.mxu0 0.0
        %431 = vmatprep.subr.mxu0 0.0
        %432 = vmatpush1.msra.mxu0 0.0
        %433 = vmatprep.subr.mxu0 0.0
        %434 = vmatpush1.msra.mxu0 0.0
        %435 = vmatprep.subr.mxu0 0.0
        %436 = vmatpush1.msra.mxu0 0.0
        %437 = vmatprep.subr.mxu0 0.0
        %438 = vmatpush1.msra.mxu0 0.0
        %439 = vmatprep.subr.mxu0 0.0
        %440 = vmatpush1.msra.mxu0 0.0
        %441 = vmatprep.subr.mxu0 0.0
        %442 = vmatpush1.msra.mxu0 0.0
        %443 = vmatprep.subr.mxu0 0.0
        %444 = vmatpush1.msra.mxu0 0.0
        %445 = vmatprep.subr.mxu0 0.0
        %446 = vmatpush1.msra.mxu0 0.0
        %447 = vmatprep.subr.mxu0 0.0
        %448 = vmatpush1.msra.mxu0 0.0
        %449 = vmatprep.subr.mxu0 0.0
        %450 = vmatpush1.msra.mxu0 0.0
        %451 = vmatprep.subr.mxu0 0.0
        %452 = vmatpush1.msra.mxu0 0.0
        %453 = vmatprep.subr.mxu0 0.0
        %454 = vmatpush1.msra.mxu0 0.0
        %455 = vmatprep.subr.mxu0 0.0
        %456 = vmatpush1.msra.mxu0 0.0
        %457 = vmatprep.subr.mxu0 0.0
        %458 = vmatpush1.msra.mxu0 0.0
        %459 = vmatprep.subr.mxu0 0.0
        %460 = vmatpush1.msra.mxu0 0.0
        %461 = vmatprep.mubr.bf16.mxu0 0
        %462 = vmatmul.mubr.bf16.gmra.mrb[0].mxu0 %v395
        %v463 = vpop.f32.mrb[0].mxu0
        %v464 = vadd.f32 0.0, %v463
        %v465 = vpop.f32.mrb[0].mxu0
        %v466 = vpop.f32.mrb[0].mxu0
        %v467 = vpop.f32.mrb[0].mxu0
        %468 = vdwg.mxu0
        %469 = vmatprep.subr.mxu0 0.0
        %470 = vmatpush1.msra.mxu0 %v376
        %471 = vmatprep.subr.mxu0 0.0
        %472 = vmatpush1.msra.mxu0 %v377
        %473 = vmatprep.subr.mxu0 0.0
        %474 = vmatpush1.msra.mxu0 %v378
        %475 = vmatprep.subr.mxu0 0.0
        %476 = vmatpush1.msra.mxu0 %v379
        %477 = vmatprep.subr.mxu0 0.0
        %478 = vmatpush1.msra.mxu0 %v380
        %479 = vmatprep.subr.mxu0 0.0
        %480 = vmatpush1.msra.mxu0 %v381
        %481 = vmatprep.subr.mxu0 0.0
        %482 = vmatpush1.msra.mxu0 %v382
        %483 = vmatprep.subr.mxu0 0.0
        %484 = vmatpush1.msra.mxu0 %v383
        %485 = vmatprep.subr.mxu0 0.0
        %486 = vmatpush1.msra.mxu0 %v384
        %487 = vmatprep.subr.mxu0 0.0
        %488 = vmatpush1.msra.mxu0 %v385
        %489 = vmatprep.subr.mxu0 0.0
        %490 = vmatpush1.msra.mxu0 %v386
        %491 = vmatprep.subr.mxu0 0.0
        %492 = vmatpush1.msra.mxu0 %v387
        %493 = vmatprep.subr.mxu0 0.0
        %494 = vmatpush1.msra.mxu0 %v388
        %495 = vmatprep.subr.mxu0 0.0
        %496 = vmatpush1.msra.mxu0 %v389
        %497 = vmatprep.subr.mxu0 0.0
        %498 = vmatpush1.msra.mxu0 %v390
        %499 = vmatprep.subr.mxu0 0.0
        %500 = vmatpush1.msra.mxu0 %v391
        %501 = vmatprep.subr.mxu0 0.0
        %502 = vmatpush1.msra.mxu0 0.0
        %503 = vmatprep.subr.mxu0 0.0
        %504 = vmatpush1.msra.mxu0 0.0
        %505 = vmatprep.subr.mxu0 0.0
        %506 = vmatpush1.msra.mxu0 0.0
        %507 = vmatprep.subr.mxu0 0.0
        %508 = vmatpush1.msra.mxu0 0.0
        %509 = vmatprep.subr.mxu0 0.0
        %510 = vmatpush1.msra.mxu0 0.0
        %511 = vmatprep.subr.mxu0 0.0
        %512 = vmatpush1.msra.mxu0 0.0
        %513 = vmatprep.subr.mxu0 0.0
        %514 = vmatpush1.msra.mxu0 0.0
        %515 = vmatprep.subr.mxu0 0.0
        %516 = vmatpush1.msra.mxu0 0.0
        %517 = vmatprep.subr.mxu0 0.0
        %518 = vmatpush1.msra.mxu0 0.0
        %519 = vmatprep.subr.mxu0 0.0
        %520 = vmatpush1.msra.mxu0 0.0
        %521 = vmatprep.subr.mxu0 0.0
        %522 = vmatpush1.msra.mxu0 0.0
        %523 = vmatprep.subr.mxu0 0.0
        %524 = vmatpush1.msra.mxu0 0.0
        %525 = vmatprep.subr.mxu0 0.0
        %526 = vmatpush1.msra.mxu0 0.0
        %527 = vmatprep.subr.mxu0 0.0
        %528 = vmatpush1.msra.mxu0 0.0
        %529 = vmatprep.subr.mxu0 0.0
        %530 = vmatpush1.msra.mxu0 0.0
        %531 = vmatprep.subr.mxu0 0.0
        %532 = vmatpush1.msra.mxu0 0.0
        %533 = vmatprep.mubr.f32.mxu0 0.0
        %534 = vmatmul.mubr.f32.gmra.mrb[0].mxu0 %v371
        %v535 = vpop.f32.mrb[0].mxu0
        %v536 = vadd.f32 %v464, %v535
        %v537 = vpop.f32.mrb[0].mxu0
        %538 = vdwg.mxu0
        %v539 = vld [vmem:[%s308] sm:$0xff]
        %v540 = vadd.f32 %v536, %v539
        %v541 = vmul.f32 %v540, 0.17677669
        %vm542 = vcmp.ge.f32.partialorder %v541, 0.0
        %v543 = vmul.f32 %v541, 0.2
        %v544 = vsel %vm542, %v541, %v543
        %v545 = vsub.f32 0.0, %v544
        %v546 = vmul.f32 %v545, 1.442695
        %v547 = vpow.pop %v546
        %v548 = vld [vmem:[%s312] sm:$0xff]
        %v549 = vmul.f32 %v547, %v548
        %v550 = vld [vmem:[#allocation3] sm:$0x1]
        %vm551 = vcmask 7168
        %v552 = vsel %vm551, %v549, 0.0
        %553 = vadd.xlane.f32.xlu0 %v552
        %v554 = vpop.xlane.xlu0 %553
        %v555 = vrot.slane %v554, 4
        %v556 = vadd.f32 %v554, %v555
        %v557 = vrot.slane %v556, 2
        %v558 = vadd.f32 %v556, %v557
        %v559 = vrot.slane %v558, 1
        %v560 = vadd.f32 %v558, %v559
        %s561 = vtos %v560
        %v562 = vstv %s561
        %v563 = vadd.f32 %v550, %v562
        %vm564 = vcmask 0
        %565 = vst.msk [vmem:[#allocation3] sm:$0x1] %vm564, %v563
        %567 = vset.pattern.permute.xlu0 0
        %568 = vperm.xlu0 %567, %v549
        %v569 = vpop.permute.xlu0 %568
        %v571 = vmul.f32 %v371, %v569
        %v572 = vpack.c.bf16 %v571, %v571
        %v573 = vld [vmem:[#allocation2] sm:$0xff]
        %v574 = vld [vmem:[#allocation2 + $0x8] sm:$0xff]
        %575 = vxpose.xlu0.c.b16.start [1/8] %v323, 128
        %576 = vxpose.xlu0.c.b16.cont [2/8] 0, 128
        %577 = vxpose.xlu0.c.b16.cont [3/8] 0, 128
        %578 = vxpose.xlu0.c.b16.cont [4/8] 0, 128
        %579 = vxpose.xlu0.c.b16.cont [5/8] 0, 128
        %580 = vxpose.xlu0.c.b16.cont [6/8] 0, 128
        %581 = vxpose.xlu0.c.b16.cont [7/8] 0, 128
        %582 = vxpose.xlu0.c.b16.end [8/8] 0, 128
        %v583 = vpop.trf.xlu0
        %v584 = vpop.trf.xlu0
        %v585 = vpop.trf.xlu0
        %v586 = vpop.trf.xlu0
        %v587 = vpop.trf.xlu0
        %v588 = vpop.trf.xlu0
        %v589 = vpop.trf.xlu0
        %v590 = vpop.trf.xlu0
        %vm591 = vcmask 64512
        %v593 = vsel %vm591, %v583, 0
        %vm595 = vcmask 1043456
        %v597 = vsel %vm595, %v572, 0
        %599 = vmatprep.subr.bf16.mxu0 0
        %600 = vmatpush1.bf16.msra.mxu0 %v597
        %601 = vmatprep.subr.bf16.mxu0 0
        %602 = vmatpush1.bf16.msra.mxu0 0
        %603 = vmatprep.subr.bf16.mxu0 0
        %604 = vmatpush1.bf16.msra.mxu0 0
        %605 = vmatprep.subr.bf16.mxu0 0
        %606 = vmatpush1.bf16.msra.mxu0 0
        %607 = vmatprep.subr.bf16.mxu0 0
        %608 = vmatpush1.bf16.msra.mxu0 0
        %609 = vmatprep.subr.bf16.mxu0 0
        %610 = vmatpush1.bf16.msra.mxu0 0
        %611 = vmatprep.subr.bf16.mxu0 0
        %612 = vmatpush1.bf16.msra.mxu0 0
        %613 = vmatprep.subr.bf16.mxu0 0
        %614 = vmatpush1.bf16.msra.mxu0 0
        %615 = vmatprep.subr.bf16.mxu0 0
        %616 = vmatpush1.bf16.msra.mxu0 0
        %617 = vmatprep.subr.bf16.mxu0 0
        %618 = vmatpush1.bf16.msra.mxu0 0
        %619 = vmatprep.subr.bf16.mxu0 0
        %620 = vmatpush1.bf16.msra.mxu0 0
        %621 = vmatprep.subr.bf16.mxu0 0
        %622 = vmatpush1.bf16.msra.mxu0 0
        %623 = vmatprep.subr.bf16.mxu0 0
        %624 = vmatpush1.bf16.msra.mxu0 0
        %625 = vmatprep.subr.bf16.mxu0 0
        %626 = vmatpush1.bf16.msra.mxu0 0
        %627 = vmatprep.subr.bf16.mxu0 0
        %628 = vmatpush1.bf16.msra.mxu0 0
        %629 = vmatprep.subr.bf16.mxu0 0
        %630 = vmatpush1.bf16.msra.mxu0 0
        %631 = vmatprep.mubr.bf16.mxu0 0
        %632 = vmatmul.mubr.bf16.gmra.mrb[0].mxu0 %v593
        %v633 = vpop.f32.mrb[0].mxu0
        %v634 = vadd.f32 0.0, %v633
        %v635 = vpop.f32.mrb[0].mxu0
        %v636 = vpop.f32.mrb[0].mxu0
        %v637 = vadd.f32 0.0, %v636
        %v638 = vpop.f32.mrb[0].mxu0
        %639 = vdwg.mxu0
        %v640 = vadd.f32 %v573, %v634
        %v641 = vadd.f32 %v574, %v637
        %642 = vst [vmem:[#allocation2] sm:$0xff] %v640
        %643 = vst [vmem:[#allocation2 + $0x8] sm:$0xff] %v641
        %p644 = scmp.eq.s32.totalorder %s19, 2
        // Predicated region
        $region53: #{tgnn_forward.7} parent=47 // pred_check
          %p645 = pneg %p644
        $region54: #{tgnn_forward.7} parent=47 // pred_check_branch
          %647 = sbr.rel (%p645) target = $region56
        $region55: #{tgnn_forward.7} parent=47 // pred_region
          %v648 = vld [vmem:[#allocation3] sm:$0x1]
          %v649 = vrcp.pop %v648
          %v650 = vld [vmem:[#allocation2] sm:$0xff]
          %v651 = vld [vmem:[#allocation2 + $0x8] sm:$0xff]
          %v653 = vlaneseq
          %v654 = vshrl.u32 %v653, 7
          %v655 = vsub.s32 0, %v654
          %v656 = vrot.slane %v649, %v655
          %657 = vset.pattern.permute.xlu0 0
          %658 = vperm.xlu0 %657, %v656
          %v659 = vpop.permute.xlu0 %658
          %v661 = vmul.f32 %v650, %v659
          %v662 = vmul.f32 %v651, %v659
          %vm663 = vcmp.ge.f32.partialorder %v661, 0.0
          %vm664 = vcmp.ge.f32.partialorder %v662, 0.0
          %v665 = vmul.f32 %v661, 0.2
          %v666 = vmul.f32 %v662, 0.2
          %v667 = vsel %vm663, %v661, %v665
          %v668 = vsel %vm664, %v662, %v666
          %669 = vst [vmem:[#allocation4] sm:$0xff] %v667
          %670 = vst [vmem:[#allocation4 + $0x8] sm:$0xff] %v668
        $region56: #{tgnn_forward.7} parent=47 // pred_fallthru
          _
        // Predicated region
        $region57: #{tgnn_forward.7} parent=47 // pred_check
          %p671 = pneg %p199
        $region58: #{tgnn_forward.7} parent=47 // pred_check_branch
          %673 = sbr.rel (%p671) target = $region60
        $region59: #{tgnn_forward.7} parent=47 // pred_region
          %s675 = ssub.s32 256, 256
          %676 = vsyncadd [#allocation5], %s675
          %s677 = sshll.u32 [#allocation4], 4
          %s678 = int_to_ptr.vmem [resolvable:$true] %s677
          %683 = dma.vmem_to_hbm [thread:$0]  %s678, 256, %s7, [#allocation5], 128, 128, 8
        $region60: #{tgnn_forward.7} parent=47 // pred_fallthru
          _
        // Predicated region
        $region61: #{tgnn_forward.7} parent=47 // pred_check
          %p684 = pneg %p199
        $region62: #{tgnn_forward.7} parent=47 // pred_check_branch
          %686 = sbr.rel (%p684) target = $region64
        $region63: #{tgnn_forward.7} parent=47 // pred_region
          %687 = dma.done [#allocation5], 256
        $region64: #{tgnn_forward.7} parent=47 // pred_fallthru
          _
      $region48: #{tgnn_forward.7} parent=5 // pred_fallthru
        _
      %p688 = scmp.le.s32.totalorder 2, %s14
      // Predicated region
      $region65: #{tgnn_forward.7} parent=5 // pred_check
        %p689 = pneg %p688
      $region66: #{tgnn_forward.7} parent=5 // pred_check_branch
        %691 = sbr.rel (%p689) target = $region68
      $region67: #{tgnn_forward.7} parent=5 // pred_region
        %s692 = ssub.s32 %s14, 2
      $region68: #{tgnn_forward.7} parent=5 // pred_fallthru
        _
    $region6: #{tgnn_forward.7} parent=1 // loop_footer
      %s18 = sadd.s32 1, %s14
    $region7: #{tgnn_forward.7} parent=1 // loop_footer_branch
      %13 = sbr.rel target = $region3
    $region8: #{tgnn_forward.7} parent=1 // loop_exit
      _
    %693 = vsyncpa [#allocation5], 1
    %s694 = scalar_lea.sflag [#allocation5], 1
    %695 = vsyncpa %s694, 1

</llo_original>
